<compile_context>
chip_gen: v7x
topology: tpu7x:2x2x1
jax: 0.10.0
libtpu: 0.0.40
codegen_flags: <defaults>
</compile_context>

<pallas_src>
import functools
import inspect
import math

import jax
import jax.numpy as jnp
import numpy as np
from jax.experimental import pallas as pl
from jax.experimental.pallas import tpu as pltpu


def _round_up(x, m):
    return ((x + m - 1) // m) * m


_HAS_BUFFERED = hasattr(pl, "Buffered")
try:
    _HAS_PIPELINE_MODE = "pipeline_mode" in inspect.signature(pl.BlockSpec).parameters
except (TypeError, ValueError):
    _HAS_PIPELINE_MODE = False


def _vsn_kernel(x_ref, wcat_ref, b1_ref, bs_ref, w2_ref, b2_ref,
                out_ref, wgt_ref, *, n_vars, hp, nvhp):
    """One TILE_N-row slab.

    x_ref   : [TN, total]        bf16  concatenated inputs (streamed row tile)
    wcat_ref: [total, NVHP+SelP] bf16  [fused layer-1 blocks | selection weight]
    b1_ref  : [1, NVHP]          f32   layer-1 bias (per-variable HP blocks)
    bs_ref  : [1, SelP]          f32   selection bias; padded lanes = -1e30
    w2_ref  : [n_vars, HP, HP]   bf16  per-variable layer-2 weights (dense)
    b2_ref  : [n_vars, HP]       f32   per-variable layer-2 bias
    out_ref : [TN, HP]           f32   softmax-weighted sum of embeddings
    wgt_ref : [TN, SelP]         f32   selection weights (padded lanes = 0)
    """
    x = x_ref[...]

    # One MXU pass over K=total: all per-variable first layers + selection logits.
    hcat = jnp.dot(x, wcat_ref[...], preferred_element_type=jnp.float32)
    h1 = jnp.maximum(hcat[:, :nvhp] + b1_ref[...], 0.0)   # ReLU (+ eval dropout = id)
    logits = hcat[:, nvhp:] + bs_ref[...]                  # [TN, SelP]

    # Softmax over variables; exact normalization so returned weights sum to 1.
    m = jnp.max(logits, axis=-1, keepdims=True)
    e = jnp.exp(logits - m)                                # padded lanes -> 0
    weights = e / jnp.sum(e, axis=-1, keepdims=True)       # [TN, SelP] f32
    wgt_ref[...] = weights

    # Per-variable second layer + softmax-weighted sum. Dense [HP, HP] matmuls
    # (no block-diagonal zero-flop waste); variable weighting / reduction is
    # pure VPU work (no E/S broadcast / fold matmuls).
    b2_all = b2_ref[...]
    acc = jnp.zeros(out_ref.shape, jnp.float32)
    for i in range(n_vars):                                # static unroll
        h_i = h1[:, i * hp:(i + 1) * hp].astype(jnp.bfloat16)   # lane-aligned slice
        emb = jnp.dot(h_i, w2_ref[i], preferred_element_type=jnp.float32)
        emb = jnp.maximum(emb + b2_all[i:i + 1, :], 0.0)   # ReLU (+ eval dropout = id)
        acc = acc + weights[:, i:i + 1] * emb
    out_ref[...] = acc


def prepare_vsn_params(params, input_sizes, hidden_size):
    """Assemble the fused / lane-padded operands ONCE at model setup (host numpy).

    Per-variable hidden blocks are padded to HP = round_up(H, 128) lanes; when
    H is already a multiple of 128 the layer-2 matmuls are fully dense.
    """
    names = list(input_sizes.keys())
    sizes = [int(input_sizes[n]) for n in names]
    n_vars, total, H = len(names), sum(sizes), int(hidden_size)
    HP = _round_up(H, 128)
    NVHP = n_vars * HP
    SelP = _round_up(n_vars, 128)

    wcat = np.zeros((total, NVHP + SelP), np.float32)   # [W1_all | Ws]
    b1p = np.zeros((1, NVHP), np.float32)
    w2s = np.zeros((n_vars, HP, HP), np.float32)
    b2s = np.zeros((n_vars, HP), np.float32)
    off = 0
    for i, n in enumerate(names):
        sz = sizes[i]
        wcat[off:off + sz, i * HP:i * HP + H] = np.asarray(params[n]["w1"])
        b1p[0, i * HP:i * HP + H] = np.asarray(params[n]["b1"])
        w2s[i, :H, :H] = np.asarray(params[n]["w2"])
        b2s[i, :H] = np.asarray(params[n]["b2"])
        off += sz
    wcat[:, NVHP:NVHP + n_vars] = np.asarray(params["_selection"]["w"])
    bsel = np.full((1, SelP), -1e30, np.float32)        # pad lanes softmax to 0
    bsel[0, :n_vars] = np.asarray(params["_selection"]["b"])

    return dict(
        names=tuple(names), sizes=tuple(sizes), hidden_size=H,
        n_vars=n_vars, total=total, hp=HP, nvhp=NVHP, selp=SelP,
        wcat=jnp.asarray(wcat, jnp.bfloat16),
        b1=jnp.asarray(b1p),
        bsel=jnp.asarray(bsel),
        w2=jnp.asarray(w2s, jnp.bfloat16),
        b2=jnp.asarray(b2s),
    )


def _pick_tile_n(N, resident_bytes, per_row_bytes, vmem_budget):
    """Row tile: 16-row granularity for small N, 256-row multiples (MXU) for big N."""
    n16 = _round_up(N, 16)
    avail = vmem_budget - resident_bytes - (4 << 20)     # headroom for temporaries
    cap = max(int(avail // max(per_row_bytes, 1)), 16)
    tn = min(n16, 1024, cap)
    if tn >= 256:
        tn = (tn // 256) * 256
    else:
        tn = max(16, (tn // 16) * 16)
    return int(tn)


def variable_selection_forward(inputs, prepared, tile_n=None):
    """inputs: dict name -> [..., size_i]. Returns (weighted_sum, weights)."""
    names = prepared["names"]
    total, H = prepared["total"], prepared["hidden_size"]
    n_vars, HP, NVHP, SelP = (prepared["n_vars"], prepared["hp"],
                              prepared["nvhp"], prepared["selp"])

    combined = jnp.concatenate([inputs[n] for n in names], axis=-1)
    assert combined.shape[-1] == total
    lead = combined.shape[:-1]
    N = math.prod(lead) if lead else 1

    # Per-chip VMEM budget (v7x has 64 MiB vs 128 MiB on v5e/v6e).
    try:
        vmem_cap = int(pltpu.get_tpu_info().vmem_capacity_bytes)
    except Exception:
        vmem_cap = 64 * 1024 * 1024                      # conservative (v7x)
    vmem_limit = min(100 * 1024 * 1024, int(vmem_cap * 0.75))

    # Resident (single-buffered) weights + per-row streamed bytes (double-buffered).
    resident_bytes = (prepared["wcat"].size * 2 + prepared["w2"].size * 2
                      + (prepared["b1"].size + prepared["bsel"].size
                         + prepared["b2"].size) * 4)
    per_row_bytes = 2 * (total * 2) + 2 * (HP * 4) + 2 * (SelP * 4)

    TN = int(tile_n) if tile_n else _pick_tile_n(N, resident_bytes, per_row_bytes,
                                                 vmem_limit)
    N_pad = _round_up(N, TN)

    x2 = combined.reshape(N, total).astype(jnp.bfloat16)
    if N_pad != N:
        x2 = jnp.pad(x2, ((0, N_pad - N), (0, 0)))

    kernel = functools.partial(_vsn_kernel, n_vars=n_vars, hp=HP, nvhp=NVHP)
    grid = (N_pad // TN,)

    flops = 2 * N_pad * total * (NVHP + SelP) + 2 * N_pad * n_vars * HP * HP
    bytes_accessed = (N_pad * total * 2 + resident_bytes + N_pad * (HP + SelP) * 4)

    def run(single_buffer):
        fixkw = ({"pipeline_mode": pl.Buffered(1)}
                 if (single_buffer and _HAS_BUFFERED and _HAS_PIPELINE_MODE) else {})

        def fix(arr):
            nd = arr.ndim
            return pl.BlockSpec(arr.shape, lambda i, nd=nd: (0,) * nd, **fixkw)

        return pl.pallas_call(
            kernel,
            grid=grid,
            in_specs=[
                pl.BlockSpec((TN, total), lambda i: (i, 0)),   # x (streamed)
                fix(prepared["wcat"]),                          # [W1_all | Ws] (resident)
                fix(prepared["b1"]),
                fix(prepared["bsel"]),
                fix(prepared["w2"]),                            # per-var W2 (resident)
                fix(prepared["b2"]),
            ],
            out_specs=(pl.BlockSpec((TN, HP), lambda i: (i, 0)),
                       pl.BlockSpec((TN, SelP), lambda i: (i, 0))),
            out_shape=(jax.ShapeDtypeStruct((N_pad, HP), jnp.float32),
                       jax.ShapeDtypeStruct((N_pad, SelP), jnp.float32)),
            compiler_params=pltpu.CompilerParams(
                dimension_semantics=("parallel",),
                vmem_limit_bytes=int(vmem_limit)),
            cost_estimate=pl.CostEstimate(
                flops=int(flops),
                transcendentals=int(N_pad * SelP),
                bytes_accessed=int(bytes_accessed)),
        )(x2, prepared["wcat"], prepared["b1"], prepared["bsel"],
          prepared["w2"], prepared["b2"])

    if _HAS_BUFFERED and _HAS_PIPELINE_MODE:
        try:
            out_pad, wgt_pad = run(True)
        except Exception:
            out_pad, wgt_pad = run(False)   # older JAX: fall back to default buffering
    else:
        out_pad, wgt_pad = run(False)

    out = out_pad[:N, :H].reshape(*lead, H)
    wgt = wgt_pad[:N, :n_vars].reshape(*lead, n_vars)
    return out, wgt


def reference_forward(inputs, params):
    """Pure-JAX f32 reference matching the PyTorch module (eval mode)."""
    names = list(inputs.keys())
    embs = {}
    for n in names:
        x = inputs[n]
        h = jnp.maximum(x @ params[n]["w1"] + params[n]["b1"], 0.0)
        h = jnp.maximum(h @ params[n]["w2"] + params[n]["b2"], 0.0)
        embs[n] = h
    combined = jnp.concatenate([inputs[n] for n in names], axis=-1)
    logits = combined @ params["_selection"]["w"] + params["_selection"]["b"]
    weights = jax.nn.softmax(logits, axis=-1)
    weighted_sum = sum(weights[..., i:i + 1] * embs[n] for i, n in enumerate(names))
    return weighted_sum, weights


def init_params(key, input_sizes, hidden_size):
    """Deterministic synthetic init (PyTorch-Linear-style uniform ranges)."""
    params = {}
    H = hidden_size
    for n, size in input_sizes.items():
        key, k1, k2, k3, k4 = jax.random.split(key, 5)
        lim1 = 1.0 / math.sqrt(size)
        lim2 = 1.0 / math.sqrt(H)
        params[n] = {
            "w1": jax.random.uniform(k1, (size, H), jnp.float32, -lim1, lim1),
            "b1": jax.random.uniform(k2, (H,), jnp.float32, -lim1, lim1),
            "w2": jax.random.uniform(k3, (H, H), jnp.float32, -lim2, lim2),
            "b2": jax.random.uniform(k4, (H,), jnp.float32, -lim2, lim2),
        }
    total = sum(input_sizes.values())
    n_vars = len(input_sizes)
    key, k1, k2 = jax.random.split(key, 3)
    lims = 1.0 / math.sqrt(total)
    params["_selection"] = {
        "w": jax.random.uniform(k1, (total, n_vars), jnp.float32, -lims, lims),
        "b": jax.random.uniform(k2, (n_vars,), jnp.float32, -lims, lims),
    }
    return params


if __name__ == "__main__":
    key = jax.random.PRNGKey(0)
    B, T = 2, 8
    input_sizes = {"observed": 4, "known": 8, "static": 16}

    # Two configs: H=32 (sub-128, lane-padded path) and H=128 (dense, lane-aligned
    # path the perf review targets). Both small.
    for H in (32, 128):
        params = init_params(jax.random.PRNGKey(0), input_sizes, H)
        prepared = prepare_vsn_params(params, input_sizes, H)   # cached at setup

        inputs = {}
        for n, size in input_sizes.items():
            key, sub = jax.random.split(key)
            inputs[n] = jax.random.normal(sub, (B, T, size), jnp.float32)

        out, wgt = variable_selection_forward(inputs, prepared)
        jax.block_until_ready((out, wgt))

        ref_out, ref_wgt = reference_forward(inputs, params)
        assert out.shape == (B, T, H) and wgt.shape == (B, T, len(input_sizes))
        # bf16 matmul operands / bf16 input cast (f32 accumulation) -> loosened tols.
        assert jnp.allclose(out, ref_out, atol=5e-2, rtol=5e-2), \
            (H, float(jnp.max(jnp.abs(out - ref_out))))
        assert jnp.allclose(wgt, ref_wgt, atol=2e-2, rtol=2e-2), \
            (H, float(jnp.max(jnp.abs(wgt - ref_wgt))))

    print("KERNEL_OK")
</pallas_src>

<mosaic_0001>
module attributes {stable_mosaic.version = 11 : i64} {
  func.func @_vsn_kernel(%arg0: i32, %arg1: memref<16x28xbf16, #tpu.memory_space<vmem>>, %arg2: memref<28x512xbf16, #tpu.memory_space<vmem>>, %arg3: memref<1x384xf32, #tpu.memory_space<vmem>>, %arg4: memref<1x128xf32, #tpu.memory_space<vmem>>, %arg5: memref<3x128x128xbf16, #tpu.memory_space<vmem>>, %arg6: memref<3x128xf32, #tpu.memory_space<vmem>>, %arg7: memref<16x128xf32, #tpu.memory_space<vmem>>, %arg8: memref<16x128xf32, #tpu.memory_space<vmem>>) attributes {dimension_semantics = [#tpu.dimension_semantics<parallel>], iteration_bounds = array<i64: 1>, scalar_prefetch = 0 : i64, scratch_operands = 0 : i64, tpu.core_type = #tpu.core_type<tc>, window_params = [{transform_indices = @transform_0, window_bounds = array<i64: 16, 28>}, {pipeline_mode = #tpu.pipeline_mode<synchronous>, transform_indices = @transform_1, window_bounds = array<i64: 28, 512>}, {pipeline_mode = #tpu.pipeline_mode<synchronous>, transform_indices = @transform_2, window_bounds = array<i64: 1, 384>}, {pipeline_mode = #tpu.pipeline_mode<synchronous>, transform_indices = @transform_3, window_bounds = array<i64: 1, 128>}, {pipeline_mode = #tpu.pipeline_mode<synchronous>, transform_indices = @transform_4, window_bounds = array<i64: 3, 128, 128>}, {pipeline_mode = #tpu.pipeline_mode<synchronous>, transform_indices = @transform_5, window_bounds = array<i64: 3, 128>}, {transform_indices = @transform_6, window_bounds = array<i64: 16, 128>}, {transform_indices = @transform_7, window_bounds = array<i64: 16, 128>}]} {
    %c0 = arith.constant 0 : index
    %c0_0 = arith.constant 0 : index
    %0 = vector.load %arg1[%c0, %c0_0] : memref<16x28xbf16, #tpu.memory_space<vmem>>, vector<16x28xbf16>
    %c0_1 = arith.constant 0 : index
    %c0_2 = arith.constant 0 : index
    %1 = vector.load %arg2[%c0_1, %c0_2] : memref<28x512xbf16, #tpu.memory_space<vmem>>, vector<28x512xbf16>
    %cst = arith.constant dense<0.000000e+00> : vector<16x512xf32>
    %2 = tpu.matmul %0, %1, %cst {dimension_numbers = #tpu.dot_dimension_numbers<[1], [0], [0], [1], [0, 0, 1, 1], [], []>} : vector<16x28xbf16>, vector<28x512xbf16>, vector<16x512xf32> -> vector<16x512xf32>
    %3 = vector.extract_strided_slice %2 {offsets = [0, 0], sizes = [16, 384], strides = [1, 1]} : vector<16x512xf32> to vector<16x384xf32>
    %c0_3 = arith.constant 0 : index
    %c0_4 = arith.constant 0 : index
    %4 = vector.load %arg3[%c0_3, %c0_4] : memref<1x384xf32, #tpu.memory_space<vmem>>, vector<1x384xf32>
    %5 = vector.broadcast %4 : vector<1x384xf32> to vector<16x384xf32>
    %6 = arith.addf %3, %5 : vector<16x384xf32>
    %cst_5 = arith.constant 0.000000e+00 : f32
    %7 = vector.broadcast %cst_5 : f32 to vector<16x384xf32>
    %8 = arith.maximumf %6, %7 : vector<16x384xf32>
    %9 = vector.extract_strided_slice %2 {offsets = [0, 384], sizes = [16, 128], strides = [1, 1]} : vector<16x512xf32> to vector<16x128xf32>
    %c0_6 = arith.constant 0 : index
    %c0_7 = arith.constant 0 : index
    %10 = vector.load %arg4[%c0_6, %c0_7] : memref<1x128xf32, #tpu.memory_space<vmem>>, vector<1x128xf32>
    %11 = vector.broadcast %10 : vector<1x128xf32> to vector<16x128xf32>
    %12 = arith.addf %9, %11 : vector<16x128xf32>
    %cst_8 = arith.constant dense<0xFF800000> : vector<16xf32>
    %13 = vector.multi_reduction <maximumf>, %12, %cst_8 [1] : vector<16x128xf32> to vector<16xf32>
    %14 = vector.shape_cast %13 : vector<16xf32> to vector<16x1xf32>
    %15 = vector.broadcast %14 : vector<16x1xf32> to vector<16x128xf32>
    %16 = arith.subf %12, %15 : vector<16x128xf32>
    %17 = math.exp %16 : vector<16x128xf32>
    %cst_9 = arith.constant dense<0.000000e+00> : vector<16xf32>
    %18 = vector.multi_reduction <add>, %17, %cst_9 [1] : vector<16x128xf32> to vector<16xf32>
    %19 = vector.shape_cast %18 : vector<16xf32> to vector<16x1xf32>
    %20 = vector.broadcast %19 : vector<16x1xf32> to vector<16x128xf32>
    %21 = arith.divf %17, %20 : vector<16x128xf32>
    %c0_10 = arith.constant 0 : index
    %c0_11 = arith.constant 0 : index
    %22 = vector.load %arg8[%c0_10, %c0_11] : memref<16x128xf32, #tpu.memory_space<vmem>>, vector<16x128xf32>
    tpu.vector_store %arg8[%c0_10, %c0_11], %21 {strides = array<i32>} : memref<16x128xf32, #tpu.memory_space<vmem>>, vector<16x128xf32>,
    %c0_12 = arith.constant 0 : index
    %c0_13 = arith.constant 0 : index
    %23 = vector.load %arg6[%c0_12, %c0_13] : memref<3x128xf32, #tpu.memory_space<vmem>>, vector<3x128xf32>
    %cst_14 = arith.constant 0.000000e+00 : f32
    %24 = vector.broadcast %cst_14 : f32 to vector<16x128xf32>
    %25 = vector.extract_strided_slice %8 {offsets = [0, 0], sizes = [16, 128], strides = [1, 1]} : vector<16x384xf32> to vector<16x128xf32>
    %26 = arith.truncf %25 : vector<16x128xf32> to vector<16x128xbf16>
    %c0_15 = arith.constant 0 : index
    %c0_16 = arith.constant 0 : index
    %c0_17 = arith.constant 0 : index
    %27 = vector.load %arg5[%c0_15, %c0_16, %c0_17] : memref<3x128x128xbf16, #tpu.memory_space<vmem>>, vector<1x128x128xbf16>
    %28 = vector.shape_cast %27 : vector<1x128x128xbf16> to vector<128x128xbf16>
    %cst_18 = arith.constant dense<0.000000e+00> : vector<16x128xf32>
    %29 = tpu.matmul %26, %28, %cst_18 {dimension_numbers = #tpu.dot_dimension_numbers<[1], [0], [0], [1], [0, 0, 1, 1], [], []>} : vector<16x128xbf16>, vector<128x128xbf16>, vector<16x128xf32> -> vector<16x128xf32>
    %30 = vector.extract_strided_slice %23 {offsets = [0, 0], sizes = [1, 128], strides = [1, 1]} : vector<3x128xf32> to vector<1x128xf32>
    %31 = vector.broadcast %30 : vector<1x128xf32> to vector<16x128xf32>
    %32 = arith.addf %29, %31 : vector<16x128xf32>
    %cst_19 = arith.constant 0.000000e+00 : f32
    %33 = vector.broadcast %cst_19 : f32 to vector<16x128xf32>
    %34 = arith.maximumf %32, %33 : vector<16x128xf32>
    %35 = vector.extract_strided_slice %21 {offsets = [0, 0], sizes = [16, 1], strides = [1, 1]} : vector<16x128xf32> to vector<16x1xf32>
    %36 = vector.broadcast %35 : vector<16x1xf32> to vector<16x128xf32>
    %37 = arith.mulf %36, %34 : vector<16x128xf32>
    %38 = arith.addf %24, %37 : vector<16x128xf32>
    %39 = vector.extract_strided_slice %8 {offsets = [0, 128], sizes = [16, 128], strides = [1, 1]} : vector<16x384xf32> to vector<16x128xf32>
    %40 = arith.truncf %39 : vector<16x128xf32> to vector<16x128xbf16>
    %c1 = arith.constant 1 : index
    %c0_20 = arith.constant 0 : index
    %c0_21 = arith.constant 0 : index
    %41 = vector.load %arg5[%c1, %c0_20, %c0_21] : memref<3x128x128xbf16, #tpu.memory_space<vmem>>, vector<1x128x128xbf16>
    %42 = vector.shape_cast %41 : vector<1x128x128xbf16> to vector<128x128xbf16>
    %cst_22 = arith.constant dense<0.000000e+00> : vector<16x128xf32>
    %43 = tpu.matmul %40, %42, %cst_22 {dimension_numbers = #tpu.dot_dimension_numbers<[1], [0], [0], [1], [0, 0, 1, 1], [], []>} : vector<16x128xbf16>, vector<128x128xbf16>, vector<16x128xf32> -> vector<16x128xf32>
    %44 = vector.extract_strided_slice %23 {offsets = [1, 0], sizes = [1, 128], strides = [1, 1]} : vector<3x128xf32> to vector<1x128xf32>
    %45 = vector.broadcast %44 : vector<1x128xf32> to vector<16x128xf32>
    %46 = arith.addf %43, %45 : vector<16x128xf32>
    %cst_23 = arith.constant 0.000000e+00 : f32
    %47 = vector.broadcast %cst_23 : f32 to vector<16x128xf32>
    %48 = arith.maximumf %46, %47 : vector<16x128xf32>
    %49 = vector.extract_strided_slice %21 {offsets = [0, 1], sizes = [16, 1], strides = [1, 1]} : vector<16x128xf32> to vector<16x1xf32>
    %50 = vector.broadcast %49 : vector<16x1xf32> to vector<16x128xf32>
    %51 = arith.mulf %50, %48 : vector<16x128xf32>
    %52 = arith.addf %38, %51 : vector<16x128xf32>
    %53 = vector.extract_strided_slice %8 {offsets = [0, 256], sizes = [16, 128], strides = [1, 1]} : vector<16x384xf32> to vector<16x128xf32>
    %54 = arith.truncf %53 : vector<16x128xf32> to vector<16x128xbf16>
    %c2 = arith.constant 2 : index
    %c0_24 = arith.constant 0 : index
    %c0_25 = arith.constant 0 : index
    %55 = vector.load %arg5[%c2, %c0_24, %c0_25] : memref<3x128x128xbf16, #tpu.memory_space<vmem>>, vector<1x128x128xbf16>
    %56 = vector.shape_cast %55 : vector<1x128x128xbf16> to vector<128x128xbf16>
    %cst_26 = arith.constant dense<0.000000e+00> : vector<16x128xf32>
    %57 = tpu.matmul %54, %56, %cst_26 {dimension_numbers = #tpu.dot_dimension_numbers<[1], [0], [0], [1], [0, 0, 1, 1], [], []>} : vector<16x128xbf16>, vector<128x128xbf16>, vector<16x128xf32> -> vector<16x128xf32>
    %58 = vector.extract_strided_slice %23 {offsets = [2, 0], sizes = [1, 128], strides = [1, 1]} : vector<3x128xf32> to vector<1x128xf32>
    %59 = vector.broadcast %58 : vector<1x128xf32> to vector<16x128xf32>
    %60 = arith.addf %57, %59 : vector<16x128xf32>
    %cst_27 = arith.constant 0.000000e+00 : f32
    %61 = vector.broadcast %cst_27 : f32 to vector<16x128xf32>
    %62 = arith.maximumf %60, %61 : vector<16x128xf32>
    %63 = vector.extract_strided_slice %21 {offsets = [0, 2], sizes = [16, 1], strides = [1, 1]} : vector<16x128xf32> to vector<16x1xf32>
    %64 = vector.broadcast %63 : vector<16x1xf32> to vector<16x128xf32>
    %65 = arith.mulf %64, %62 : vector<16x128xf32>
    %66 = arith.addf %52, %65 : vector<16x128xf32>
    %c0_28 = arith.constant 0 : index
    %c0_29 = arith.constant 0 : index
    %67 = vector.load %arg7[%c0_28, %c0_29] : memref<16x128xf32, #tpu.memory_space<vmem>>, vector<16x128xf32>
    tpu.vector_store %arg7[%c0_28, %c0_29], %66 {strides = array<i32>} : memref<16x128xf32, #tpu.memory_space<vmem>>, vector<16x128xf32>,
    return
  }
  func.func @transform_0(%arg0: i32) -> (i32, i32) {
    %c0_i32 = arith.constant 0 : i32
    %c0_i32_0 = arith.constant 0 : i32
    return %arg0, %c0_i32 : i32, i32
  }
  func.func @transform_1(%arg0: i32) -> (i32, i32) {
    %c0_i32 = arith.constant 0 : i32
    %c0_i32_0 = arith.constant 0 : i32
    %c0_i32_1 = arith.constant 0 : i32
    return %c0_i32, %c0_i32_0 : i32, i32
  }
  func.func @transform_2(%arg0: i32) -> (i32, i32) {
    %c0_i32 = arith.constant 0 : i32
    %c0_i32_0 = arith.constant 0 : i32
    %c0_i32_1 = arith.constant 0 : i32
    return %c0_i32, %c0_i32_0 : i32, i32
  }
  func.func @transform_3(%arg0: i32) -> (i32, i32) {
    %c0_i32 = arith.constant 0 : i32
    %c0_i32_0 = arith.constant 0 : i32
    %c0_i32_1 = arith.constant 0 : i32
    return %c0_i32, %c0_i32_0 : i32, i32
  }
  func.func @transform_4(%arg0: i32) -> (i32, i32, i32) {
    %c0_i32 = arith.constant 0 : i32
    %c0_i32_0 = arith.constant 0 : i32
    %c0_i32_1 = arith.constant 0 : i32
    %c0_i32_2 = arith.constant 0 : i32
    return %c0_i32, %c0_i32_0, %c0_i32_1 : i32, i32, i32
  }
  func.func @transform_5(%arg0: i32) -> (i32, i32) {
    %c0_i32 = arith.constant 0 : i32
    %c0_i32_0 = arith.constant 0 : i32
    %c0_i32_1 = arith.constant 0 : i32
    return %c0_i32, %c0_i32_0 : i32, i32
  }
  func.func @transform_6(%arg0: i32) -> (i32, i32) {
    %c0_i32 = arith.constant 0 : i32
    %c0_i32_0 = arith.constant 0 : i32
    return %arg0, %c0_i32 : i32, i32
  }
  func.func @transform_7(%arg0: i32) -> (i32, i32) {
    %c0_i32 = arith.constant 0 : i32
    %c0_i32_0 = arith.constant 0 : i32
    return %arg0, %c0_i32 : i32, i32
  }
}

module attributes {stable_mosaic.version = 11 : i64} {
  func.func @_vsn_kernel(%arg0: i32, %arg1: memref<16x28xbf16, #tpu.memory_space<vmem>>, %arg2: memref<28x512xbf16, #tpu.memory_space<vmem>>, %arg3: memref<1x384xf32, #tpu.memory_space<vmem>>, %arg4: memref<1x128xf32, #tpu.memory_space<vmem>>, %arg5: memref<3x128x128xbf16, #tpu.memory_space<vmem>>, %arg6: memref<3x128xf32, #tpu.memory_space<vmem>>, %arg7: memref<16x128xf32, #tpu.memory_space<vmem>>, %arg8: memref<16x128xf32, #tpu.memory_space<vmem>>) attributes {dimension_semantics = [#tpu.dimension_semantics<parallel>], iteration_bounds = array<i64: 1>, scalar_prefetch = 0 : i64, scratch_operands = 0 : i64, tpu.core_type = #tpu.core_type<tc>, window_params = [{transform_indices = @transform_0, window_bounds = array<i64: 16, 28>}, {pipeline_mode = #tpu.pipeline_mode<synchronous>, transform_indices = @transform_1, window_bounds = array<i64: 28, 512>}, {pipeline_mode = #tpu.pipeline_mode<synchronous>, transform_indices = @transform_2, window_bounds = array<i64: 1, 384>}, {pipeline_mode = #tpu.pipeline_mode<synchronous>, transform_indices = @transform_3, window_bounds = array<i64: 1, 128>}, {pipeline_mode = #tpu.pipeline_mode<synchronous>, transform_indices = @transform_4, window_bounds = array<i64: 3, 128, 128>}, {pipeline_mode = #tpu.pipeline_mode<synchronous>, transform_indices = @transform_5, window_bounds = array<i64: 3, 128>}, {transform_indices = @transform_6, window_bounds = array<i64: 16, 128>}, {transform_indices = @transform_7, window_bounds = array<i64: 16, 128>}]} {
    %c0 = arith.constant 0 : index
    %c0_0 = arith.constant 0 : index
    %0 = vector.load %arg1[%c0, %c0_0] : memref<16x28xbf16, #tpu.memory_space<vmem>>, vector<16x28xbf16>
    %c0_1 = arith.constant 0 : index
    %c0_2 = arith.constant 0 : index
    %1 = vector.load %arg2[%c0_1, %c0_2] : memref<28x512xbf16, #tpu.memory_space<vmem>>, vector<28x512xbf16>
    %cst = arith.constant dense<0.000000e+00> : vector<16x512xf32>
    %2 = tpu.matmul %0, %1, %cst {dimension_numbers = #tpu.dot_dimension_numbers<[1], [0], [0], [1], [0, 0, 1, 1], [], []>} : vector<16x28xbf16>, vector<28x512xbf16>, vector<16x512xf32> -> vector<16x512xf32>
    %3 = vector.extract_strided_slice %2 {offsets = [0, 0], sizes = [16, 384], strides = [1, 1]} : vector<16x512xf32> to vector<16x384xf32>
    %c0_3 = arith.constant 0 : index
    %c0_4 = arith.constant 0 : index
    %4 = vector.load %arg3[%c0_3, %c0_4] : memref<1x384xf32, #tpu.memory_space<vmem>>, vector<1x384xf32>
    %5 = vector.broadcast %4 : vector<1x384xf32> to vector<16x384xf32>
    %6 = arith.addf %3, %5 : vector<16x384xf32>
    %cst_5 = arith.constant 0.000000e+00 : f32
    %7 = vector.broadcast %cst_5 : f32 to vector<16x384xf32>
    %8 = arith.maximumf %6, %7 : vector<16x384xf32>
    %9 = vector.extract_strided_slice %2 {offsets = [0, 384], sizes = [16, 128], strides = [1, 1]} : vector<16x512xf32> to vector<16x128xf32>
    %c0_6 = arith.constant 0 : index
    %c0_7 = arith.constant 0 : index
    %10 = vector.load %arg4[%c0_6, %c0_7] : memref<1x128xf32, #tpu.memory_space<vmem>>, vector<1x128xf32>
    %11 = vector.broadcast %10 : vector<1x128xf32> to vector<16x128xf32>
    %12 = arith.addf %9, %11 : vector<16x128xf32>
    %cst_8 = arith.constant dense<0xFF800000> : vector<16xf32>
    %13 = vector.multi_reduction <maximumf>, %12, %cst_8 [1] : vector<16x128xf32> to vector<16xf32>
    %14 = vector.shape_cast %13 : vector<16xf32> to vector<16x1xf32>
    %15 = vector.broadcast %14 : vector<16x1xf32> to vector<16x128xf32>
    %16 = arith.subf %12, %15 : vector<16x128xf32>
    %17 = math.exp %16 : vector<16x128xf32>
    %cst_9 = arith.constant dense<0.000000e+00> : vector<16xf32>
    %18 = vector.multi_reduction <add>, %17, %cst_9 [1] : vector<16x128xf32> to vector<16xf32>
    %19 = vector.shape_cast %18 : vector<16xf32> to vector<16x1xf32>
    %20 = vector.broadcast %19 : vector<16x1xf32> to vector<16x128xf32>
    %21 = arith.divf %17, %20 : vector<16x128xf32>
    %c0_10 = arith.constant 0 : index
    %c0_11 = arith.constant 0 : index
    %22 = vector.load %arg8[%c0_10, %c0_11] : memref<16x128xf32, #tpu.memory_space<vmem>>, vector<16x128xf32>
    tpu.vector_store %arg8[%c0_10, %c0_11], %21 {strides = array<i32>} : memref<16x128xf32, #tpu.memory_space<vmem>>, vector<16x128xf32>,
    %c0_12 = arith.constant 0 : index
    %c0_13 = arith.constant 0 : index
    %23 = vector.load %arg6[%c0_12, %c0_13] : memref<3x128xf32, #tpu.memory_space<vmem>>, vector<3x128xf32>
    %cst_14 = arith.constant 0.000000e+00 : f32
    %24 = vector.broadcast %cst_14 : f32 to vector<16x128xf32>
    %25 = vector.extract_strided_slice %8 {offsets = [0, 0], sizes = [16, 128], strides = [1, 1]} : vector<16x384xf32> to vector<16x128xf32>
    %26 = arith.truncf %25 : vector<16x128xf32> to vector<16x128xbf16>
    %c0_15 = arith.constant 0 : index
    %c0_16 = arith.constant 0 : index
    %c0_17 = arith.constant 0 : index
    %27 = vector.load %arg5[%c0_15, %c0_16, %c0_17] : memref<3x128x128xbf16, #tpu.memory_space<vmem>>, vector<1x128x128xbf16>
    %28 = vector.shape_cast %27 : vector<1x128x128xbf16> to vector<128x128xbf16>
    %cst_18 = arith.constant dense<0.000000e+00> : vector<16x128xf32>
    %29 = tpu.matmul %26, %28, %cst_18 {dimension_numbers = #tpu.dot_dimension_numbers<[1], [0], [0], [1], [0, 0, 1, 1], [], []>} : vector<16x128xbf16>, vector<128x128xbf16>, vector<16x128xf32> -> vector<16x128xf32>
    %30 = vector.extract_strided_slice %23 {offsets = [0, 0], sizes = [1, 128], strides = [1, 1]} : vector<3x128xf32> to vector<1x128xf32>
    %31 = vector.broadcast %30 : vector<1x128xf32> to vector<16x128xf32>
    %32 = arith.addf %29, %31 : vector<16x128xf32>
    %cst_19 = arith.constant 0.000000e+00 : f32
    %33 = vector.broadcast %cst_19 : f32 to vector<16x128xf32>
    %34 = arith.maximumf %32, %33 : vector<16x128xf32>
    %35 = vector.extract_strided_slice %21 {offsets = [0, 0], sizes = [16, 1], strides = [1, 1]} : vector<16x128xf32> to vector<16x1xf32>
    %36 = vector.broadcast %35 : vector<16x1xf32> to vector<16x128xf32>
    %37 = arith.mulf %36, %34 : vector<16x128xf32>
    %38 = arith.addf %24, %37 : vector<16x128xf32>
    %39 = vector.extract_strided_slice %8 {offsets = [0, 128], sizes = [16, 128], strides = [1, 1]} : vector<16x384xf32> to vector<16x128xf32>
    %40 = arith.truncf %39 : vector<16x128xf32> to vector<16x128xbf16>
    %c1 = arith.constant 1 : index
    %c0_20 = arith.constant 0 : index
    %c0_21 = arith.constant 0 : index
    %41 = vector.load %arg5[%c1, %c0_20, %c0_21] : memref<3x128x128xbf16, #tpu.memory_space<vmem>>, vector<1x128x128xbf16>
    %42 = vector.shape_cast %41 : vector<1x128x128xbf16> to vector<128x128xbf16>
    %cst_22 = arith.constant dense<0.000000e+00> : vector<16x128xf32>
    %43 = tpu.matmul %40, %42, %cst_22 {dimension_numbers = #tpu.dot_dimension_numbers<[1], [0], [0], [1], [0, 0, 1, 1], [], []>} : vector<16x128xbf16>, vector<128x128xbf16>, vector<16x128xf32> -> vector<16x128xf32>
    %44 = vector.extract_strided_slice %23 {offsets = [1, 0], sizes = [1, 128], strides = [1, 1]} : vector<3x128xf32> to vector<1x128xf32>
    %45 = vector.broadcast %44 : vector<1x128xf32> to vector<16x128xf32>
    %46 = arith.addf %43, %45 : vector<16x128xf32>
    %cst_23 = arith.constant 0.000000e+00 : f32
    %47 = vector.broadcast %cst_23 : f32 to vector<16x128xf32>
    %48 = arith.maximumf %46, %47 : vector<16x128xf32>
    %49 = vector.extract_strided_slice %21 {offsets = [0, 1], sizes = [16, 1], strides = [1, 1]} : vector<16x128xf32> to vector<16x1xf32>
    %50 = vector.broadcast %49 : vector<16x1xf32> to vector<16x128xf32>
    %51 = arith.mulf %50, %48 : vector<16x128xf32>
    %52 = arith.addf %38, %51 : vector<16x128xf32>
    %53 = vector.extract_strided_slice %8 {offsets = [0, 256], sizes = [16, 128], strides = [1, 1]} : vector<16x384xf32> to vector<16x128xf32>
    %54 = arith.truncf %53 : vector<16x128xf32> to vector<16x128xbf16>
    %c2 = arith.constant 2 : index
    %c0_24 = arith.constant 0 : index
    %c0_25 = arith.constant 0 : index
    %55 = vector.load %arg5[%c2, %c0_24, %c0_25] : memref<3x128x128xbf16, #tpu.memory_space<vmem>>, vector<1x128x128xbf16>
    %56 = vector.shape_cast %55 : vector<1x128x128xbf16> to vector<128x128xbf16>
    %cst_26 = arith.constant dense<0.000000e+00> : vector<16x128xf32>
    %57 = tpu.matmul %54, %56, %cst_26 {dimension_numbers = #tpu.dot_dimension_numbers<[1], [0], [0], [1], [0, 0, 1, 1], [], []>} : vector<16x128xbf16>, vector<128x128xbf16>, vector<16x128xf32> -> vector<16x128xf32>
    %58 = vector.extract_strided_slice %23 {offsets = [2, 0], sizes = [1, 128], strides = [1, 1]} : vector<3x128xf32> to vector<1x128xf32>
    %59 = vector.broadcast %58 : vector<1x128xf32> to vector<16x128xf32>
    %60 = arith.addf %57, %59 : vector<16x128xf32>
    %cst_27 = arith.constant 0.000000e+00 : f32
    %61 = vector.broadcast %cst_27 : f32 to vector<16x128xf32>
    %62 = arith.maximumf %60, %61 : vector<16x128xf32>
    %63 = vector.extract_strided_slice %21 {offsets = [0, 2], sizes = [16, 1], strides = [1, 1]} : vector<16x128xf32> to vector<16x1xf32>
    %64 = vector.broadcast %63 : vector<16x1xf32> to vector<16x128xf32>
    %65 = arith.mulf %64, %62 : vector<16x128xf32>
    %66 = arith.addf %52, %65 : vector<16x128xf32>
    %c0_28 = arith.constant 0 : index
    %c0_29 = arith.constant 0 : index
    %67 = vector.load %arg7[%c0_28, %c0_29] : memref<16x128xf32, #tpu.memory_space<vmem>>, vector<16x128xf32>
    tpu.vector_store %arg7[%c0_28, %c0_29], %66 {strides = array<i32>} : memref<16x128xf32, #tpu.memory_space<vmem>>, vector<16x128xf32>,
    return
  }
  func.func @transform_0(%arg0: i32) -> (i32, i32) {
    %c0_i32 = arith.constant 0 : i32
    %c0_i32_0 = arith.constant 0 : i32
    return %arg0, %c0_i32 : i32, i32
  }
  func.func @transform_1(%arg0: i32) -> (i32, i32) {
    %c0_i32 = arith.constant 0 : i32
    %c0_i32_0 = arith.constant 0 : i32
    %c0_i32_1 = arith.constant 0 : i32
    return %c0_i32, %c0_i32_0 : i32, i32
  }
  func.func @transform_2(%arg0: i32) -> (i32, i32) {
    %c0_i32 = arith.constant 0 : i32
    %c0_i32_0 = arith.constant 0 : i32
    %c0_i32_1 = arith.constant 0 : i32
    return %c0_i32, %c0_i32_0 : i32, i32
  }
  func.func @transform_3(%arg0: i32) -> (i32, i32) {
    %c0_i32 = arith.constant 0 : i32
    %c0_i32_0 = arith.constant 0 : i32
    %c0_i32_1 = arith.constant 0 : i32
    return %c0_i32, %c0_i32_0 : i32, i32
  }
  func.func @transform_4(%arg0: i32) -> (i32, i32, i32) {
    %c0_i32 = arith.constant 0 : i32
    %c0_i32_0 = arith.constant 0 : i32
    %c0_i32_1 = arith.constant 0 : i32
    %c0_i32_2 = arith.constant 0 : i32
    return %c0_i32, %c0_i32_0, %c0_i32_1 : i32, i32, i32
  }
  func.func @transform_5(%arg0: i32) -> (i32, i32) {
    %c0_i32 = arith.constant 0 : i32
    %c0_i32_0 = arith.constant 0 : i32
    %c0_i32_1 = arith.constant 0 : i32
    return %c0_i32, %c0_i32_0 : i32, i32
  }
  func.func @transform_6(%arg0: i32) -> (i32, i32) {
    %c0_i32 = arith.constant 0 : i32
    %c0_i32_0 = arith.constant 0 : i32
    return %arg0, %c0_i32 : i32, i32
  }
  func.func @transform_7(%arg0: i32) -> (i32, i32) {
    %c0_i32 = arith.constant 0 : i32
    %c0_i32_0 = arith.constant 0 : i32
    return %arg0, %c0_i32 : i32, i32
  }
}

</mosaic_0001>

<llo_original>
// kernel: tpu_custom_call.1
$region0: #{tpu_custom_call.1}
  #allocation0 [shape = 'u32[]', space=smem, size = 0x4, offset = 0x4, fixed_abs, tag = 'smem constant byte address 0x4 - core index']
  #allocation1 [shape = 'u32[144,128]{1,0:T(1,128)}', space=vmem, size = 0x12000, scoped, tag = 'internal scratch']
  %s0 = inlined_call_operand.hbm [shape: bf16[16,28], index: 0, kind: input, shape index: {}]
  %s1 = inlined_call_operand.hbm [shape: bf16[28,512], index: 1, kind: input, shape index: {}]
  %s2 = inlined_call_operand.vmem [shape: f32[1,384], index: 2, kind: input, shape index: {}]
  %s3 = inlined_call_operand.vmem [shape: f32[1,128], index: 3, kind: input, shape index: {}]
  %s4 = inlined_call_operand.hbm [shape: bf16[3,128,128], index: 4, kind: input, shape index: {}]
  %s5 = inlined_call_operand.vmem [shape: f32[3,128], index: 5, kind: input, shape index: {}]
  %s6 = inlined_call_operand.hbm [shape: f32[16,128], index: 6, kind: output, shape index: {0}]
  %s7 = inlined_call_operand.hbm [shape: f32[16,128], index: 7, kind: output, shape index: {1}]
  %8 = xla_tuple %s6, %s7
  %s9 = sld [smem:[#allocation0]]
  $region54: #{tpu_custom_call.1} parent=0
    _
  %s11 = ssub.s32 1, %s9
  %s12 = scalar_select 0, %s11, %s9
  $region1: #{tpu_custom_call.1} parent=0
    #allocation2 [shape = 'u8[4096]{0}', space=vmem, size = 0x1000, scoped, tag = 'input window, operand 0, single buffered']
    #allocation3 [shape = 's32[1]{0}', space=sflag, size = 0x4, scoped, tag = 'scoped memory for tpu_custom_call.1']
    #allocation4 [shape = 's32[1]{0}', space=sflag, size = 0x4, scoped, tag = 'scoped memory for tpu_custom_call.1']
    #allocation5 [shape = 'u8[32768]{0}', space=vmem, size = 0x8000, scoped, tag = 'input window, operand 1, single buffered']
    #allocation6 [shape = 's32[1]{0}', space=sflag, size = 0x4, scoped, tag = 'scoped memory for tpu_custom_call.1']
    #allocation7 [shape = 'u8[98304]{0}', space=vmem, size = 0x18000, scoped, tag = 'input window, operand 4, single buffered']
    #allocation8 [shape = 'u8[8192]{0}', space=vmem, size = 0x2000, scoped, tag = 'output window, operand 0, single buffered']
    #allocation9 [shape = 'u8[8192]{0}', space=vmem, size = 0x2000, scoped, tag = 'output window, operand 1, single buffered']
    #allocation10 [shape = 's32[1]{0}', space=sflag, size = 0x4, scoped, tag = 'scoped memory for tpu_custom_call.1']
    %13 = vsyncpa [#allocation3], 0
    %14 = vsyncpa [#allocation6], 0
    %15 = vsyncpa [#allocation4], 0
    %16 = vsyncpa [#allocation10], 0
    // Predicated region
    $region2: #{tpu_custom_call.1} parent=1 // pred_check
      _
    $region3: #{tpu_custom_call.1} parent=1 // pred_check_branch
      %18 = sbr.rel (0) target = $region5
    $region4: #{tpu_custom_call.1} parent=1 // pred_region
      %s20 = ssub.s32 128, 128
      %21 = vsyncadd [#allocation3], %s20
      %s22 = sshll.u32 [#allocation2], 4
      %s23 = int_to_ptr.vmem [resolvable:$true] %s22
      %28 = dma.hbm_to_vmem [thread:$0]  %s0, 128, %s23, [#allocation3], 64, 64, 4
    $region5: #{tpu_custom_call.1} parent=1 // pred_fallthru
      _
    // Predicated region
    $region6: #{tpu_custom_call.1} parent=1 // pred_check
      _
    $region7: #{tpu_custom_call.1} parent=1 // pred_check_branch
      %30 = sbr.rel (0) target = $region9
    $region8: #{tpu_custom_call.1} parent=1 // pred_region
      %s32 = ssub.s32 1024, 1024
      %33 = vsyncadd [#allocation6], %s32
      %s34 = sshll.u32 [#allocation5], 4
      %s35 = int_to_ptr.vmem [resolvable:$true] %s34
      %40 = dma.hbm_to_vmem [thread:$0]  %s1, 1024, %s35, [#allocation6], 256, 256, 16
    $region9: #{tpu_custom_call.1} parent=1 // pred_fallthru
      _
    // Predicated region
    $region10: #{tpu_custom_call.1} parent=1 // pred_check
      _
    $region11: #{tpu_custom_call.1} parent=1 // pred_check_branch
      %42 = sbr.rel (0) target = $region13
    $region12: #{tpu_custom_call.1} parent=1 // pred_region
      _
    $region13: #{tpu_custom_call.1} parent=1 // pred_fallthru
      _
    // Predicated region
    $region14: #{tpu_custom_call.1} parent=1 // pred_check
      _
    $region15: #{tpu_custom_call.1} parent=1 // pred_check_branch
      %44 = sbr.rel (0) target = $region17
    $region16: #{tpu_custom_call.1} parent=1 // pred_region
      _
    $region17: #{tpu_custom_call.1} parent=1 // pred_fallthru
      _
    // Predicated region
    $region18: #{tpu_custom_call.1} parent=1 // pred_check
      _
    $region19: #{tpu_custom_call.1} parent=1 // pred_check_branch
      %46 = sbr.rel (0) target = $region21
    $region20: #{tpu_custom_call.1} parent=1 // pred_region
      %s48 = ssub.s32 3072, 3072
      %49 = vsyncadd [#allocation6], %s48
      %s50 = sshll.u32 [#allocation7], 4
      %s51 = int_to_ptr.vmem [resolvable:$true] %s50
      %56 = dma.hbm_to_vmem [thread:$0]  %s4, 3072, %s51, [#allocation6], 64, 64, 4
    $region21: #{tpu_custom_call.1} parent=1 // pred_fallthru
      _
    // Predicated region
    $region22: #{tpu_custom_call.1} parent=1 // pred_check
      _
    $region23: #{tpu_custom_call.1} parent=1 // pred_check_branch
      %58 = sbr.rel (0) target = $region25
    $region24: #{tpu_custom_call.1} parent=1 // pred_region
      _
    $region25: #{tpu_custom_call.1} parent=1 // pred_fallthru
      _
    // Predicated region
    $region26: #{tpu_custom_call.1} parent=1 // pred_check
      _
    $region27: #{tpu_custom_call.1} parent=1 // pred_check_branch
      %60 = sbr.rel (0) target = $region29
    $region28: #{tpu_custom_call.1} parent=1 // pred_region
      %61 = dma.done [#allocation3], 128
    $region29: #{tpu_custom_call.1} parent=1 // pred_fallthru
      _
    // Predicated region
    $region30: #{tpu_custom_call.1} parent=1 // pred_check
      _
    $region31: #{tpu_custom_call.1} parent=1 // pred_check_branch
      %63 = sbr.rel (0) target = $region33
    $region32: #{tpu_custom_call.1} parent=1 // pred_region
      %64 = dma.done [#allocation6], 1024
    $region33: #{tpu_custom_call.1} parent=1 // pred_fallthru
      _
    // Predicated region
    $region34: #{tpu_custom_call.1} parent=1 // pred_check
      _
    $region35: #{tpu_custom_call.1} parent=1 // pred_check_branch
      %66 = sbr.rel (0) target = $region37
    $region36: #{tpu_custom_call.1} parent=1 // pred_region
      %67 = dma.done [#allocation6], 3072
    $region37: #{tpu_custom_call.1} parent=1 // pred_fallthru
      _
    %v69 = vld [vmem:[#allocation2] sm:$0xf]
    %v70 = vld [vmem:[#allocation2 + $0x4] sm:$0xf]
    %v71 = vld [vmem:[#allocation5] sm:$0xff]
    %v72 = vld [vmem:[#allocation5 + $0x8] sm:$0xff]
    %v73 = vld [vmem:[#allocation5 + $0x10] sm:$0xff]
    %v74 = vld [vmem:[#allocation5 + $0x18] sm:$0xff]
    %v75 = vld [vmem:[#allocation5 + $0x20] sm:$0xff]
    %v76 = vld [vmem:[#allocation5 + $0x28] sm:$0xff]
    %v77 = vld [vmem:[#allocation5 + $0x30] sm:$0x33]
    %v78 = vld [vmem:[#allocation5 + $0x38] sm:$0x33]
    %v81 = vunpack.c.l.b16 %v69
    %v82 = vunpack.c.l.b16 %v70
    %v83 = vpack.c.b16 %v82, %v81
    %v92 = vunpack.c.l.b16 %v71
    %v93 = vunpack.c.h.b16 %v71
    %v94 = vunpack.c.l.b16 %v72
    %v95 = vunpack.c.h.b16 %v72
    %v96 = vunpack.c.l.b16 %v73
    %v97 = vunpack.c.h.b16 %v73
    %v98 = vunpack.c.l.b16 %v74
    %v99 = vunpack.c.h.b16 %v74
    %v100 = vunpack.c.l.b16 %v75
    %v101 = vunpack.c.h.b16 %v75
    %v102 = vunpack.c.l.b16 %v76
    %v103 = vunpack.c.h.b16 %v76
    %v104 = vunpack.c.l.b16 %v77
    %v105 = vunpack.c.h.b16 %v77
    %v106 = vunpack.c.l.b16 %v78
    %v107 = vunpack.c.h.b16 %v78
    %v108 = vpack.c.b16 %v96, %v92
    %v109 = vpack.c.b16 %v97, %v93
    %v110 = vpack.c.b16 %v98, %v94
    %v111 = vpack.c.b16 %v99, %v95
    %v112 = vpack.c.b16 %v104, %v100
    %v113 = vpack.c.b16 %v105, %v101
    %v114 = vpack.c.b16 %v106, %v102
    %v115 = vpack.c.b16 %v107, %v103
    %vm120 = vcmask 228352
    %v122 = vsel %vm120, %v83, 0
    %vm124 = vcmask 1045504
    %v126 = vsel %vm124, %v112, 0
    %v129 = vsel %vm124, %v113, 0
    %v132 = vsel %vm124, %v114, 0
    %v135 = vsel %vm124, %v115, 0
    %137 = vmatprep.subr.bf16.mxu0 %v109
    %138 = vmatpush1.bf16.msra.mxu0 %v108
    %139 = vmatprep.subr.bf16.mxu0 %v129
    %140 = vmatpush1.bf16.msra.mxu0 %v126
    %141 = vmatprep.subr.bf16.mxu0 0
    %142 = vmatpush1.bf16.msra.mxu0 0
    %143 = vmatprep.subr.bf16.mxu0 0
    %144 = vmatpush1.bf16.msra.mxu0 0
    %145 = vmatprep.subr.bf16.mxu0 0
    %146 = vmatpush1.bf16.msra.mxu0 0
    %147 = vmatprep.subr.bf16.mxu0 0
    %148 = vmatpush1.bf16.msra.mxu0 0
    %149 = vmatprep.subr.bf16.mxu0 0
    %150 = vmatpush1.bf16.msra.mxu0 0
    %151 = vmatprep.subr.bf16.mxu0 0
    %152 = vmatpush1.bf16.msra.mxu0 0
    %153 = vmatprep.subr.bf16.mxu0 0
    %154 = vmatpush1.bf16.msra.mxu0 0
    %155 = vmatprep.subr.bf16.mxu0 0
    %156 = vmatpush1.bf16.msra.mxu0 0
    %157 = vmatprep.subr.bf16.mxu0 0
    %158 = vmatpush1.bf16.msra.mxu0 0
    %159 = vmatprep.subr.bf16.mxu0 0
    %160 = vmatpush1.bf16.msra.mxu0 0
    %161 = vmatprep.subr.bf16.mxu0 0
    %162 = vmatpush1.bf16.msra.mxu0 0
    %163 = vmatprep.subr.bf16.mxu0 0
    %164 = vmatpush1.bf16.msra.mxu0 0
    %165 = vmatprep.subr.bf16.mxu0 0
    %166 = vmatpush1.bf16.msra.mxu0 0
    %167 = vmatprep.subr.bf16.mxu0 0
    %168 = vmatpush1.bf16.msra.mxu0 0
    %169 = vmatprep.mubr.bf16.mxu0 0
    %170 = vmatmul.mubr.bf16.gmra.mrb[0].mxu0 %v122
    %v171 = vpop.f32.mrb[0].mxu0
    %v172 = vadd.f32 0.0, %v171
    %v173 = vpop.f32.mrb[0].mxu0
    %v174 = vadd.f32 0.0, %v173
    %v175 = vpop.f32.mrb[0].mxu0
    %v176 = vadd.f32 0.0, %v175
    %v177 = vpop.f32.mrb[0].mxu0
    %v178 = vadd.f32 0.0, %v177
    %179 = vdwg.mxu0
    %180 = vmatprep.subr.bf16.mxu0 %v111
    %181 = vmatpush1.bf16.msra.mxu0 %v110
    %182 = vmatprep.subr.bf16.mxu0 %v135
    %183 = vmatpush1.bf16.msra.mxu0 %v132
    %184 = vmatprep.subr.bf16.mxu0 0
    %185 = vmatpush1.bf16.msra.mxu0 0
    %186 = vmatprep.subr.bf16.mxu0 0
    %187 = vmatpush1.bf16.msra.mxu0 0
    %188 = vmatprep.subr.bf16.mxu0 0
    %189 = vmatpush1.bf16.msra.mxu0 0
    %190 = vmatprep.subr.bf16.mxu0 0
    %191 = vmatpush1.bf16.msra.mxu0 0
    %192 = vmatprep.subr.bf16.mxu0 0
    %193 = vmatpush1.bf16.msra.mxu0 0
    %194 = vmatprep.subr.bf16.mxu0 0
    %195 = vmatpush1.bf16.msra.mxu0 0
    %196 = vmatprep.subr.bf16.mxu0 0
    %197 = vmatpush1.bf16.msra.mxu0 0
    %198 = vmatprep.subr.bf16.mxu0 0
    %199 = vmatpush1.bf16.msra.mxu0 0
    %200 = vmatprep.subr.bf16.mxu0 0
    %201 = vmatpush1.bf16.msra.mxu0 0
    %202 = vmatprep.subr.bf16.mxu0 0
    %203 = vmatpush1.bf16.msra.mxu0 0
    %204 = vmatprep.subr.bf16.mxu0 0
    %205 = vmatpush1.bf16.msra.mxu0 0
    %206 = vmatprep.subr.bf16.mxu0 0
    %207 = vmatpush1.bf16.msra.mxu0 0
    %208 = vmatprep.subr.bf16.mxu0 0
    %209 = vmatpush1.bf16.msra.mxu0 0
    %210 = vmatprep.subr.bf16.mxu0 0
    %211 = vmatpush1.bf16.msra.mxu0 0
    %212 = vmatprep.mubr.bf16.mxu0 0
    %213 = vmatmul.mubr.bf16.gmra.mrb[0].mxu0 %v122
    %v214 = vpop.f32.mrb[0].mxu0
    %v215 = vadd.f32 0.0, %v214
    %v216 = vpop.f32.mrb[0].mxu0
    %v217 = vadd.f32 0.0, %v216
    %v218 = vpop.f32.mrb[0].mxu0
    %v219 = vadd.f32 0.0, %v218
    %v220 = vpop.f32.mrb[0].mxu0
    %v221 = vadd.f32 0.0, %v220
    %222 = vdwg.mxu0
    %v223 = vld [vmem:[%s2] sm:$0x7]
    %v225 = vlaneseq
    %v226 = vshrl.u32 %v225, 7
    %v227 = vsub.s32 0, %v226
    %v228 = vrot.slane %v223, %v227
    %v229 = vlaneseq
    %v230 = vshrl.u32 %v229, 7
    %v231 = vsub.s32 1, %v230
    %v232 = vrot.slane %v223, %v231
    %v233 = vlaneseq
    %v234 = vshrl.u32 %v233, 7
    %v235 = vsub.s32 2, %v234
    %v236 = vrot.slane %v223, %v235
    %v240 = vadd.f32 %v172, %v228
    %v241 = vadd.f32 %v174, %v232
    %v242 = vadd.f32 %v215, %v236
    %v243 = vadd.f32 %v176, %v228
    %v244 = vadd.f32 %v178, %v232
    %v245 = vadd.f32 %v219, %v236
    %v246 = vmax.f32 %v240, 0.0
    %v247 = vmax.f32 %v241, 0.0
    %v248 = vmax.f32 %v242, 0.0
    %v249 = vmax.f32 %v243, 0.0
    %v250 = vmax.f32 %v244, 0.0
    %v251 = vmax.f32 %v245, 0.0
    %v252 = vld [vmem:[%s3] sm:$0x1]
    %v254 = vlaneseq
    %v255 = vshrl.u32 %v254, 7
    %v256 = vsub.s32 0, %v255
    %v257 = vrot.slane %v252, %v256
    %v259 = vadd.f32 %v217, %v257
    %v260 = vadd.f32 %v221, %v257
    %261 = vmax.xlane.f32.xlu0 %v259
    %v262 = vpop.xlane.xlu0 %261
    %263 = vmax.xlane.f32.xlu0 %v260
    %v264 = vpop.xlane.xlu0 %263
    %v265 = vsub.f32 %v259, %v262
    %v266 = vsub.f32 %v260, %v264
    %v267 = vmul.f32 %v265, 1.442695
    %v268 = vpow.pop %v267
    %v269 = vmul.f32 %v266, 1.442695
    %v270 = vpow.pop %v269
    %271 = vadd.xlane.f32.xlu0 %v268
    %v272 = vpop.xlane.xlu0 %271
    %273 = vadd.xlane.f32.xlu0 %v270
    %v274 = vpop.xlane.xlu0 %273
    %v275 = vrcp.pop %v272
    %v276 = vmul.f32 %v268, %v275
    %v277 = vrcp.pop %v274
    %v278 = vmul.f32 %v270, %v277
    %279 = vst [vmem:[#allocation9] sm:$0xff] %v276
    %280 = vst [vmem:[#allocation9 + $0x8] sm:$0xff] %v278
    %v281 = vld [vmem:[%s5] sm:$0x7]
    %v282 = vpack.c.bf16 %v249, %v246
    %v283 = vld [vmem:[#allocation7] sm:$0xf]
    %v284 = vld [vmem:[#allocation7 + $0x4] sm:$0xf]
    %v285 = vld [vmem:[#allocation7 + $0x8] sm:$0xf]
    %v286 = vld [vmem:[#allocation7 + $0xc] sm:$0xf]
    %v287 = vld [vmem:[#allocation7 + $0x10] sm:$0xf]
    %v288 = vld [vmem:[#allocation7 + $0x14] sm:$0xf]
    %v289 = vld [vmem:[#allocation7 + $0x18] sm:$0xf]
    %v290 = vld [vmem:[#allocation7 + $0x1c] sm:$0xf]
    %v291 = vld [vmem:[#allocation7 + $0x20] sm:$0xf]
    %v292 = vld [vmem:[#allocation7 + $0x24] sm:$0xf]
    %v293 = vld [vmem:[#allocation7 + $0x28] sm:$0xf]
    %v294 = vld [vmem:[#allocation7 + $0x2c] sm:$0xf]
    %v295 = vld [vmem:[#allocation7 + $0x30] sm:$0xf]
    %v296 = vld [vmem:[#allocation7 + $0x34] sm:$0xf]
    %v297 = vld [vmem:[#allocation7 + $0x38] sm:$0xf]
    %v298 = vld [vmem:[#allocation7 + $0x3c] sm:$0xf]
    %v299 = vlaneseq
    %v300 = vshrl.u32 %v299, 7
    %v301 = vsub.s32 0, %v300
    %v302 = vrot.slane %v281, %v301
    %v319 = vunpack.c.l.b16 %v283
    %v320 = vunpack.c.l.b16 %v284
    %v321 = vunpack.c.l.b16 %v285
    %v322 = vunpack.c.l.b16 %v286
    %v323 = vunpack.c.l.b16 %v287
    %v324 = vunpack.c.l.b16 %v288
    %v325 = vunpack.c.l.b16 %v289
    %v326 = vunpack.c.l.b16 %v290
    %v327 = vunpack.c.l.b16 %v291
    %v328 = vunpack.c.l.b16 %v292
    %v329 = vunpack.c.l.b16 %v293
    %v330 = vunpack.c.l.b16 %v294
    %v331 = vunpack.c.l.b16 %v295
    %v332 = vunpack.c.l.b16 %v296
    %v333 = vunpack.c.l.b16 %v297
    %v334 = vunpack.c.l.b16 %v298
    %v335 = vpack.c.b16 %v320, %v319
    %v336 = vpack.c.b16 %v322, %v321
    %v337 = vpack.c.b16 %v324, %v323
    %v338 = vpack.c.b16 %v326, %v325
    %v339 = vpack.c.b16 %v328, %v327
    %v340 = vpack.c.b16 %v330, %v329
    %v341 = vpack.c.b16 %v332, %v331
    %v342 = vpack.c.b16 %v334, %v333
    %351 = vmatprep.subr.bf16.mxu0 0
    %352 = vmatpush1.bf16.msra.mxu0 %v335
    %353 = vmatprep.subr.bf16.mxu0 0
    %354 = vmatpush1.bf16.msra.mxu0 %v336
    %355 = vmatprep.subr.bf16.mxu0 0
    %356 = vmatpush1.bf16.msra.mxu0 %v337
    %357 = vmatprep.subr.bf16.mxu0 0
    %358 = vmatpush1.bf16.msra.mxu0 %v338
    %359 = vmatprep.subr.bf16.mxu0 0
    %360 = vmatpush1.bf16.msra.mxu0 %v339
    %361 = vmatprep.subr.bf16.mxu0 0
    %362 = vmatpush1.bf16.msra.mxu0 %v340
    %363 = vmatprep.subr.bf16.mxu0 0
    %364 = vmatpush1.bf16.msra.mxu0 %v341
    %365 = vmatprep.subr.bf16.mxu0 0
    %366 = vmatpush1.bf16.msra.mxu0 %v342
    %367 = vmatprep.subr.bf16.mxu0 0
    %368 = vmatpush1.bf16.msra.mxu0 0
    %369 = vmatprep.subr.bf16.mxu0 0
    %370 = vmatpush1.bf16.msra.mxu0 0
    %371 = vmatprep.subr.bf16.mxu0 0
    %372 = vmatpush1.bf16.msra.mxu0 0
    %373 = vmatprep.subr.bf16.mxu0 0
    %374 = vmatpush1.bf16.msra.mxu0 0
    %375 = vmatprep.subr.bf16.mxu0 0
    %376 = vmatpush1.bf16.msra.mxu0 0
    %377 = vmatprep.subr.bf16.mxu0 0
    %378 = vmatpush1.bf16.msra.mxu0 0
    %379 = vmatprep.subr.bf16.mxu0 0
    %380 = vmatpush1.bf16.msra.mxu0 0
    %381 = vmatprep.subr.bf16.mxu0 0
    %382 = vmatpush1.bf16.msra.mxu0 0
    %383 = vmatprep.mubr.bf16.mxu0 0
    %384 = vmatmul.mubr.bf16.gmra.mrb[0].mxu0 %v282
    %v385 = vpop.f32.mrb[0].mxu0
    %v386 = vadd.f32 %v302, %v385
    %v387 = vpop.f32.mrb[0].mxu0
    %v388 = vpop.f32.mrb[0].mxu0
    %v389 = vadd.f32 %v302, %v388
    %v390 = vpop.f32.mrb[0].mxu0
    %391 = vdwg.mxu0
    %v392 = vmax.f32 %v386, 0.0
    %v393 = vmax.f32 %v389, 0.0
    %395 = vset.pattern.permute.xlu0 0
    %396 = vperm.xlu0 %395, %v276
    %v397 = vpop.permute.xlu0 %396
    %400 = vset.pattern.permute.xlu0 0
    %401 = vperm.xlu0 %400, %v278
    %v402 = vpop.permute.xlu0 %401
    %v404 = vmul.f32 %v397, %v392
    %v405 = vmul.f32 %v402, %v393
    %v406 = vadd.f32 %v404, 0.0
    %v407 = vadd.f32 %v405, 0.0
    %v408 = vpack.c.bf16 %v250, %v247
    %s409 = scalar_lea.vmem [#allocation7], 64
    %v410 = vld [vmem:[%s409] sm:$0xf]
    %v411 = vld [vmem:[%s409 + $0x4] sm:$0xf]
    %v412 = vld [vmem:[%s409 + $0x8] sm:$0xf]
    %v413 = vld [vmem:[%s409 + $0xc] sm:$0xf]
    %v414 = vld [vmem:[%s409 + $0x10] sm:$0xf]
    %v415 = vld [vmem:[%s409 + $0x14] sm:$0xf]
    %v416 = vld [vmem:[%s409 + $0x18] sm:$0xf]
    %v417 = vld [vmem:[%s409 + $0x1c] sm:$0xf]
    %v418 = vld [vmem:[%s409 + $0x20] sm:$0xf]
    %v419 = vld [vmem:[%s409 + $0x24] sm:$0xf]
    %v420 = vld [vmem:[%s409 + $0x28] sm:$0xf]
    %v421 = vld [vmem:[%s409 + $0x2c] sm:$0xf]
    %v422 = vld [vmem:[%s409 + $0x30] sm:$0xf]
    %v423 = vld [vmem:[%s409 + $0x34] sm:$0xf]
    %v424 = vld [vmem:[%s409 + $0x38] sm:$0xf]
    %v425 = vld [vmem:[%s409 + $0x3c] sm:$0xf]
    %v426 = vlaneseq
    %v427 = vshrl.u32 %v426, 7
    %v428 = vsub.s32 1, %v427
    %v429 = vrot.slane %v281, %v428
    %v446 = vunpack.c.l.b16 %v410
    %v447 = vunpack.c.l.b16 %v411
    %v448 = vunpack.c.l.b16 %v412
    %v449 = vunpack.c.l.b16 %v413
    %v450 = vunpack.c.l.b16 %v414
    %v451 = vunpack.c.l.b16 %v415
    %v452 = vunpack.c.l.b16 %v416
    %v453 = vunpack.c.l.b16 %v417
    %v454 = vunpack.c.l.b16 %v418
    %v455 = vunpack.c.l.b16 %v419
    %v456 = vunpack.c.l.b16 %v420
    %v457 = vunpack.c.l.b16 %v421
    %v458 = vunpack.c.l.b16 %v422
    %v459 = vunpack.c.l.b16 %v423
    %v460 = vunpack.c.l.b16 %v424
    %v461 = vunpack.c.l.b16 %v425
    %v462 = vpack.c.b16 %v447, %v446
    %v463 = vpack.c.b16 %v449, %v448
    %v464 = vpack.c.b16 %v451, %v450
    %v465 = vpack.c.b16 %v453, %v452
    %v466 = vpack.c.b16 %v455, %v454
    %v467 = vpack.c.b16 %v457, %v456
    %v468 = vpack.c.b16 %v459, %v458
    %v469 = vpack.c.b16 %v461, %v460
    %478 = vmatprep.subr.bf16.mxu0 0
    %479 = vmatpush1.bf16.msra.mxu0 %v462
    %480 = vmatprep.subr.bf16.mxu0 0
    %481 = vmatpush1.bf16.msra.mxu0 %v463
    %482 = vmatprep.subr.bf16.mxu0 0
    %483 = vmatpush1.bf16.msra.mxu0 %v464
    %484 = vmatprep.subr.bf16.mxu0 0
    %485 = vmatpush1.bf16.msra.mxu0 %v465
    %486 = vmatprep.subr.bf16.mxu0 0
    %487 = vmatpush1.bf16.msra.mxu0 %v466
    %488 = vmatprep.subr.bf16.mxu0 0
    %489 = vmatpush1.bf16.msra.mxu0 %v467
    %490 = vmatprep.subr.bf16.mxu0 0
    %491 = vmatpush1.bf16.msra.mxu0 %v468
    %492 = vmatprep.subr.bf16.mxu0 0
    %493 = vmatpush1.bf16.msra.mxu0 %v469
    %494 = vmatprep.subr.bf16.mxu0 0
    %495 = vmatpush1.bf16.msra.mxu0 0
    %496 = vmatprep.subr.bf16.mxu0 0
    %497 = vmatpush1.bf16.msra.mxu0 0
    %498 = vmatprep.subr.bf16.mxu0 0
    %499 = vmatpush1.bf16.msra.mxu0 0
    %500 = vmatprep.subr.bf16.mxu0 0
    %501 = vmatpush1.bf16.msra.mxu0 0
    %502 = vmatprep.subr.bf16.mxu0 0
    %503 = vmatpush1.bf16.msra.mxu0 0
    %504 = vmatprep.subr.bf16.mxu0 0
    %505 = vmatpush1.bf16.msra.mxu0 0
    %506 = vmatprep.subr.bf16.mxu0 0
    %507 = vmatpush1.bf16.msra.mxu0 0
    %508 = vmatprep.subr.bf16.mxu0 0
    %509 = vmatpush1.bf16.msra.mxu0 0
    %510 = vmatprep.mubr.bf16.mxu0 0
    %511 = vmatmul.mubr.bf16.gmra.mrb[0].mxu0 %v408
    %v512 = vpop.f32.mrb[0].mxu0
    %v513 = vadd.f32 %v429, %v512
    %v514 = vpop.f32.mrb[0].mxu0
    %v515 = vpop.f32.mrb[0].mxu0
    %v516 = vadd.f32 %v429, %v515
    %v517 = vpop.f32.mrb[0].mxu0
    %518 = vdwg.mxu0
    %v519 = vmax.f32 %v513, 0.0
    %v520 = vmax.f32 %v516, 0.0
    %521 = vset.pattern.permute.xlu0 1
    %522 = vperm.xlu0 %521, %v276
    %v523 = vpop.permute.xlu0 %522
    %525 = vset.pattern.permute.xlu0 1
    %526 = vperm.xlu0 %525, %v278
    %v527 = vpop.permute.xlu0 %526
    %v529 = vmul.f32 %v523, %v519
    %v530 = vmul.f32 %v527, %v520
    %v531 = vadd.f32 %v406, %v529
    %v532 = vadd.f32 %v407, %v530
    %v533 = vpack.c.bf16 %v251, %v248
    %s534 = scalar_lea.vmem [#allocation7], 128
    %v535 = vld [vmem:[%s534] sm:$0xf]
    %v536 = vld [vmem:[%s534 + $0x4] sm:$0xf]
    %v537 = vld [vmem:[%s534 + $0x8] sm:$0xf]
    %v538 = vld [vmem:[%s534 + $0xc] sm:$0xf]
    %v539 = vld [vmem:[%s534 + $0x10] sm:$0xf]
    %v540 = vld [vmem:[%s534 + $0x14] sm:$0xf]
    %v541 = vld [vmem:[%s534 + $0x18] sm:$0xf]
    %v542 = vld [vmem:[%s534 + $0x1c] sm:$0xf]
    %v543 = vld [vmem:[%s534 + $0x20] sm:$0xf]
    %v544 = vld [vmem:[%s534 + $0x24] sm:$0xf]
    %v545 = vld [vmem:[%s534 + $0x28] sm:$0xf]
    %v546 = vld [vmem:[%s534 + $0x2c] sm:$0xf]
    %v547 = vld [vmem:[%s534 + $0x30] sm:$0xf]
    %v548 = vld [vmem:[%s534 + $0x34] sm:$0xf]
    %v549 = vld [vmem:[%s534 + $0x38] sm:$0xf]
    %v550 = vld [vmem:[%s534 + $0x3c] sm:$0xf]
    %v551 = vlaneseq
    %v552 = vshrl.u32 %v551, 7
    %v553 = vsub.s32 2, %v552
    %v554 = vrot.slane %v281, %v553
    %v571 = vunpack.c.l.b16 %v535
    %v572 = vunpack.c.l.b16 %v536
    %v573 = vunpack.c.l.b16 %v537
    %v574 = vunpack.c.l.b16 %v538
    %v575 = vunpack.c.l.b16 %v539
    %v576 = vunpack.c.l.b16 %v540
    %v577 = vunpack.c.l.b16 %v541
    %v578 = vunpack.c.l.b16 %v542
    %v579 = vunpack.c.l.b16 %v543
    %v580 = vunpack.c.l.b16 %v544
    %v581 = vunpack.c.l.b16 %v545
    %v582 = vunpack.c.l.b16 %v546
    %v583 = vunpack.c.l.b16 %v547
    %v584 = vunpack.c.l.b16 %v548
    %v585 = vunpack.c.l.b16 %v549
    %v586 = vunpack.c.l.b16 %v550
    %v587 = vpack.c.b16 %v572, %v571
    %v588 = vpack.c.b16 %v574, %v573
    %v589 = vpack.c.b16 %v576, %v575
    %v590 = vpack.c.b16 %v578, %v577
    %v591 = vpack.c.b16 %v580, %v579
    %v592 = vpack.c.b16 %v582, %v581
    %v593 = vpack.c.b16 %v584, %v583
    %v594 = vpack.c.b16 %v586, %v585
    %603 = vmatprep.subr.bf16.mxu0 0
    %604 = vmatpush1.bf16.msra.mxu0 %v587
    %605 = vmatprep.subr.bf16.mxu0 0
    %606 = vmatpush1.bf16.msra.mxu0 %v588
    %607 = vmatprep.subr.bf16.mxu0 0
    %608 = vmatpush1.bf16.msra.mxu0 %v589
    %609 = vmatprep.subr.bf16.mxu0 0
    %610 = vmatpush1.bf16.msra.mxu0 %v590
    %611 = vmatprep.subr.bf16.mxu0 0
    %612 = vmatpush1.bf16.msra.mxu0 %v591
    %613 = vmatprep.subr.bf16.mxu0 0
    %614 = vmatpush1.bf16.msra.mxu0 %v592
    %615 = vmatprep.subr.bf16.mxu0 0
    %616 = vmatpush1.bf16.msra.mxu0 %v593
    %617 = vmatprep.subr.bf16.mxu0 0
    %618 = vmatpush1.bf16.msra.mxu0 %v594
    %619 = vmatprep.subr.bf16.mxu0 0
    %620 = vmatpush1.bf16.msra.mxu0 0
    %621 = vmatprep.subr.bf16.mxu0 0
    %622 = vmatpush1.bf16.msra.mxu0 0
    %623 = vmatprep.subr.bf16.mxu0 0
    %624 = vmatpush1.bf16.msra.mxu0 0
    %625 = vmatprep.subr.bf16.mxu0 0
    %626 = vmatpush1.bf16.msra.mxu0 0
    %627 = vmatprep.subr.bf16.mxu0 0
    %628 = vmatpush1.bf16.msra.mxu0 0
    %629 = vmatprep.subr.bf16.mxu0 0
    %630 = vmatpush1.bf16.msra.mxu0 0
    %631 = vmatprep.subr.bf16.mxu0 0
    %632 = vmatpush1.bf16.msra.mxu0 0
    %633 = vmatprep.subr.bf16.mxu0 0
    %634 = vmatpush1.bf16.msra.mxu0 0
    %635 = vmatprep.mubr.bf16.mxu0 0
    %636 = vmatmul.mubr.bf16.gmra.mrb[0].mxu0 %v533
    %v637 = vpop.f32.mrb[0].mxu0
    %v638 = vadd.f32 %v554, %v637
    %v639 = vpop.f32.mrb[0].mxu0
    %v640 = vpop.f32.mrb[0].mxu0
    %v641 = vadd.f32 %v554, %v640
    %v642 = vpop.f32.mrb[0].mxu0
    %643 = vdwg.mxu0
    %v644 = vmax.f32 %v638, 0.0
    %v645 = vmax.f32 %v641, 0.0
    %646 = vset.pattern.permute.xlu0 2
    %647 = vperm.xlu0 %646, %v276
    %v648 = vpop.permute.xlu0 %647
    %650 = vset.pattern.permute.xlu0 2
    %651 = vperm.xlu0 %650, %v278
    %v652 = vpop.permute.xlu0 %651
    %v654 = vmul.f32 %v648, %v644
    %v655 = vmul.f32 %v652, %v645
    %v656 = vadd.f32 %v531, %v654
    %v657 = vadd.f32 %v532, %v655
    %658 = vst [vmem:[#allocation8] sm:$0xff] %v656
    %659 = vst [vmem:[#allocation8 + $0x8] sm:$0xff] %v657
    // Predicated region
    $region38: #{tpu_custom_call.1} parent=1 // pred_check
      _
    $region39: #{tpu_custom_call.1} parent=1 // pred_check_branch
      %661 = sbr.rel (0) target = $region41
    $region40: #{tpu_custom_call.1} parent=1 // pred_region
      %s663 = ssub.s32 256, 256
      %664 = vsyncadd [#allocation4], %s663
      %s665 = sshll.u32 [#allocation8], 4
      %s666 = int_to_ptr.vmem [resolvable:$true] %s665
      %671 = dma.vmem_to_hbm [thread:$0]  %s666, 256, %s6, [#allocation4], 128, 128, 8
    $region41: #{tpu_custom_call.1} parent=1 // pred_fallthru
      _
    // Predicated region
    $region42: #{tpu_custom_call.1} parent=1 // pred_check
      _
    $region43: #{tpu_custom_call.1} parent=1 // pred_check_branch
      %673 = sbr.rel (0) target = $region45
    $region44: #{tpu_custom_call.1} parent=1 // pred_region
      %s675 = ssub.s32 256, 256
      %676 = vsyncadd [#allocation10], %s675
      %s677 = sshll.u32 [#allocation9], 4
      %s678 = int_to_ptr.vmem [resolvable:$true] %s677
      %683 = dma.vmem_to_hbm [thread:$0]  %s678, 256, %s7, [#allocation10], 128, 128, 8
    $region45: #{tpu_custom_call.1} parent=1 // pred_fallthru
      _
    // Predicated region
    $region46: #{tpu_custom_call.1} parent=1 // pred_check
      _
    $region47: #{tpu_custom_call.1} parent=1 // pred_check_branch
      %685 = sbr.rel (0) target = $region49
    $region48: #{tpu_custom_call.1} parent=1 // pred_region
      %686 = dma.done [#allocation4], 256
    $region49: #{tpu_custom_call.1} parent=1 // pred_fallthru
      _
    // Predicated region
    $region50: #{tpu_custom_call.1} parent=1 // pred_check
      _
    $region51: #{tpu_custom_call.1} parent=1 // pred_check_branch
      %688 = sbr.rel (0) target = $region53
    $region52: #{tpu_custom_call.1} parent=1 // pred_region
      %689 = dma.done [#allocation10], 256
    $region53: #{tpu_custom_call.1} parent=1 // pred_fallthru
      _
    %690 = vsyncpa [#allocation3], 1
    %691 = vsyncpa [#allocation6], 1
    %692 = vsyncpa [#allocation4], 1
    %693 = vsyncpa [#allocation10], 1

// kernel: tpu_custom_call.1
$region0: #{tpu_custom_call.1}
  #allocation0 [shape = 'u32[]', space=smem, size = 0x4, offset = 0x4, fixed_abs, tag = 'smem constant byte address 0x4 - core index']
  #allocation1 [shape = 'u32[144,128]{1,0:T(1,128)}', space=vmem, size = 0x12000, scoped, tag = 'internal scratch']
  %s0 = inlined_call_operand.hbm [shape: bf16[16,28], index: 0, kind: input, shape index: {}]
  %s1 = inlined_call_operand.hbm [shape: bf16[28,512], index: 1, kind: input, shape index: {}]
  %s2 = inlined_call_operand.vmem [shape: f32[1,384], index: 2, kind: input, shape index: {}]
  %s3 = inlined_call_operand.vmem [shape: f32[1,128], index: 3, kind: input, shape index: {}]
  %s4 = inlined_call_operand.hbm [shape: bf16[3,128,128], index: 4, kind: input, shape index: {}]
  %s5 = inlined_call_operand.vmem [shape: f32[3,128], index: 5, kind: input, shape index: {}]
  %s6 = inlined_call_operand.hbm [shape: f32[16,128], index: 6, kind: output, shape index: {0}]
  %s7 = inlined_call_operand.hbm [shape: f32[16,128], index: 7, kind: output, shape index: {1}]
  %8 = xla_tuple %s6, %s7
  %s9 = sld [smem:[#allocation0]]
  $region54: #{tpu_custom_call.1} parent=0
    _
  %s11 = ssub.s32 1, %s9
  %s12 = scalar_select 0, %s11, %s9
  $region1: #{tpu_custom_call.1} parent=0
    #allocation2 [shape = 'u8[4096]{0}', space=vmem, size = 0x1000, scoped, tag = 'input window, operand 0, single buffered']
    #allocation3 [shape = 's32[1]{0}', space=sflag, size = 0x4, scoped, tag = 'scoped memory for tpu_custom_call.1']
    #allocation4 [shape = 's32[1]{0}', space=sflag, size = 0x4, scoped, tag = 'scoped memory for tpu_custom_call.1']
    #allocation5 [shape = 'u8[32768]{0}', space=vmem, size = 0x8000, scoped, tag = 'input window, operand 1, single buffered']
    #allocation6 [shape = 's32[1]{0}', space=sflag, size = 0x4, scoped, tag = 'scoped memory for tpu_custom_call.1']
    #allocation7 [shape = 'u8[98304]{0}', space=vmem, size = 0x18000, scoped, tag = 'input window, operand 4, single buffered']
    #allocation8 [shape = 'u8[8192]{0}', space=vmem, size = 0x2000, scoped, tag = 'output window, operand 0, single buffered']
    #allocation9 [shape = 'u8[8192]{0}', space=vmem, size = 0x2000, scoped, tag = 'output window, operand 1, single buffered']
    #allocation10 [shape = 's32[1]{0}', space=sflag, size = 0x4, scoped, tag = 'scoped memory for tpu_custom_call.1']
    %13 = vsyncpa [#allocation3], 0
    %14 = vsyncpa [#allocation6], 0
    %15 = vsyncpa [#allocation4], 0
    %16 = vsyncpa [#allocation10], 0
    // Predicated region
    $region2: #{tpu_custom_call.1} parent=1 // pred_check
      _
    $region3: #{tpu_custom_call.1} parent=1 // pred_check_branch
      %18 = sbr.rel (0) target = $region5
    $region4: #{tpu_custom_call.1} parent=1 // pred_region
      %s20 = ssub.s32 128, 128
      %21 = vsyncadd [#allocation3], %s20
      %s22 = sshll.u32 [#allocation2], 4
      %s23 = int_to_ptr.vmem [resolvable:$true] %s22
      %28 = dma.hbm_to_vmem [thread:$0]  %s0, 128, %s23, [#allocation3], 64, 64, 4
    $region5: #{tpu_custom_call.1} parent=1 // pred_fallthru
      _
    // Predicated region
    $region6: #{tpu_custom_call.1} parent=1 // pred_check
      _
    $region7: #{tpu_custom_call.1} parent=1 // pred_check_branch
      %30 = sbr.rel (0) target = $region9
    $region8: #{tpu_custom_call.1} parent=1 // pred_region
      %s32 = ssub.s32 1024, 1024
      %33 = vsyncadd [#allocation6], %s32
      %s34 = sshll.u32 [#allocation5], 4
      %s35 = int_to_ptr.vmem [resolvable:$true] %s34
      %40 = dma.hbm_to_vmem [thread:$0]  %s1, 1024, %s35, [#allocation6], 256, 256, 16
    $region9: #{tpu_custom_call.1} parent=1 // pred_fallthru
      _
    // Predicated region
    $region10: #{tpu_custom_call.1} parent=1 // pred_check
      _
    $region11: #{tpu_custom_call.1} parent=1 // pred_check_branch
      %42 = sbr.rel (0) target = $region13
    $region12: #{tpu_custom_call.1} parent=1 // pred_region
      _
    $region13: #{tpu_custom_call.1} parent=1 // pred_fallthru
      _
    // Predicated region
    $region14: #{tpu_custom_call.1} parent=1 // pred_check
      _
    $region15: #{tpu_custom_call.1} parent=1 // pred_check_branch
      %44 = sbr.rel (0) target = $region17
    $region16: #{tpu_custom_call.1} parent=1 // pred_region
      _
    $region17: #{tpu_custom_call.1} parent=1 // pred_fallthru
      _
    // Predicated region
    $region18: #{tpu_custom_call.1} parent=1 // pred_check
      _
    $region19: #{tpu_custom_call.1} parent=1 // pred_check_branch
      %46 = sbr.rel (0) target = $region21
    $region20: #{tpu_custom_call.1} parent=1 // pred_region
      %s48 = ssub.s32 3072, 3072
      %49 = vsyncadd [#allocation6], %s48
      %s50 = sshll.u32 [#allocation7], 4
      %s51 = int_to_ptr.vmem [resolvable:$true] %s50
      %56 = dma.hbm_to_vmem [thread:$0]  %s4, 3072, %s51, [#allocation6], 64, 64, 4
    $region21: #{tpu_custom_call.1} parent=1 // pred_fallthru
      _
    // Predicated region
    $region22: #{tpu_custom_call.1} parent=1 // pred_check
      _
    $region23: #{tpu_custom_call.1} parent=1 // pred_check_branch
      %58 = sbr.rel (0) target = $region25
    $region24: #{tpu_custom_call.1} parent=1 // pred_region
      _
    $region25: #{tpu_custom_call.1} parent=1 // pred_fallthru
      _
    // Predicated region
    $region26: #{tpu_custom_call.1} parent=1 // pred_check
      _
    $region27: #{tpu_custom_call.1} parent=1 // pred_check_branch
      %60 = sbr.rel (0) target = $region29
    $region28: #{tpu_custom_call.1} parent=1 // pred_region
      %61 = dma.done [#allocation3], 128
    $region29: #{tpu_custom_call.1} parent=1 // pred_fallthru
      _
    // Predicated region
    $region30: #{tpu_custom_call.1} parent=1 // pred_check
      _
    $region31: #{tpu_custom_call.1} parent=1 // pred_check_branch
      %63 = sbr.rel (0) target = $region33
    $region32: #{tpu_custom_call.1} parent=1 // pred_region
      %64 = dma.done [#allocation6], 1024
    $region33: #{tpu_custom_call.1} parent=1 // pred_fallthru
      _
    // Predicated region
    $region34: #{tpu_custom_call.1} parent=1 // pred_check
      _
    $region35: #{tpu_custom_call.1} parent=1 // pred_check_branch
      %66 = sbr.rel (0) target = $region37
    $region36: #{tpu_custom_call.1} parent=1 // pred_region
      %67 = dma.done [#allocation6], 3072
    $region37: #{tpu_custom_call.1} parent=1 // pred_fallthru
      _
    %v69 = vld [vmem:[#allocation2] sm:$0xf]
    %v70 = vld [vmem:[#allocation2 + $0x4] sm:$0xf]
    %v71 = vld [vmem:[#allocation5] sm:$0xff]
    %v72 = vld [vmem:[#allocation5 + $0x8] sm:$0xff]
    %v73 = vld [vmem:[#allocation5 + $0x10] sm:$0xff]
    %v74 = vld [vmem:[#allocation5 + $0x18] sm:$0xff]
    %v75 = vld [vmem:[#allocation5 + $0x20] sm:$0xff]
    %v76 = vld [vmem:[#allocation5 + $0x28] sm:$0xff]
    %v77 = vld [vmem:[#allocation5 + $0x30] sm:$0x33]
    %v78 = vld [vmem:[#allocation5 + $0x38] sm:$0x33]
    %v81 = vunpack.c.l.b16 %v69
    %v82 = vunpack.c.l.b16 %v70
    %v83 = vpack.c.b16 %v82, %v81
    %v92 = vunpack.c.l.b16 %v71
    %v93 = vunpack.c.h.b16 %v71
    %v94 = vunpack.c.l.b16 %v72
    %v95 = vunpack.c.h.b16 %v72
    %v96 = vunpack.c.l.b16 %v73
    %v97 = vunpack.c.h.b16 %v73
    %v98 = vunpack.c.l.b16 %v74
    %v99 = vunpack.c.h.b16 %v74
    %v100 = vunpack.c.l.b16 %v75
    %v101 = vunpack.c.h.b16 %v75
    %v102 = vunpack.c.l.b16 %v76
    %v103 = vunpack.c.h.b16 %v76
    %v104 = vunpack.c.l.b16 %v77
    %v105 = vunpack.c.h.b16 %v77
    %v106 = vunpack.c.l.b16 %v78
    %v107 = vunpack.c.h.b16 %v78
    %v108 = vpack.c.b16 %v96, %v92
    %v109 = vpack.c.b16 %v97, %v93
    %v110 = vpack.c.b16 %v98, %v94
    %v111 = vpack.c.b16 %v99, %v95
    %v112 = vpack.c.b16 %v104, %v100
    %v113 = vpack.c.b16 %v105, %v101
    %v114 = vpack.c.b16 %v106, %v102
    %v115 = vpack.c.b16 %v107, %v103
    %vm120 = vcmask 228352
    %v122 = vsel %vm120, %v83, 0
    %vm124 = vcmask 1045504
    %v126 = vsel %vm124, %v112, 0
    %v129 = vsel %vm124, %v113, 0
    %v132 = vsel %vm124, %v114, 0
    %v135 = vsel %vm124, %v115, 0
    %137 = vmatprep.subr.bf16.mxu0 %v109
    %138 = vmatpush1.bf16.msra.mxu0 %v108
    %139 = vmatprep.subr.bf16.mxu0 %v129
    %140 = vmatpush1.bf16.msra.mxu0 %v126
    %141 = vmatprep.subr.bf16.mxu0 0
    %142 = vmatpush1.bf16.msra.mxu0 0
    %143 = vmatprep.subr.bf16.mxu0 0
    %144 = vmatpush1.bf16.msra.mxu0 0
    %145 = vmatprep.subr.bf16.mxu0 0
    %146 = vmatpush1.bf16.msra.mxu0 0
    %147 = vmatprep.subr.bf16.mxu0 0
    %148 = vmatpush1.bf16.msra.mxu0 0
    %149 = vmatprep.subr.bf16.mxu0 0
    %150 = vmatpush1.bf16.msra.mxu0 0
    %151 = vmatprep.subr.bf16.mxu0 0
    %152 = vmatpush1.bf16.msra.mxu0 0
    %153 = vmatprep.subr.bf16.mxu0 0
    %154 = vmatpush1.bf16.msra.mxu0 0
    %155 = vmatprep.subr.bf16.mxu0 0
    %156 = vmatpush1.bf16.msra.mxu0 0
    %157 = vmatprep.subr.bf16.mxu0 0
    %158 = vmatpush1.bf16.msra.mxu0 0
    %159 = vmatprep.subr.bf16.mxu0 0
    %160 = vmatpush1.bf16.msra.mxu0 0
    %161 = vmatprep.subr.bf16.mxu0 0
    %162 = vmatpush1.bf16.msra.mxu0 0
    %163 = vmatprep.subr.bf16.mxu0 0
    %164 = vmatpush1.bf16.msra.mxu0 0
    %165 = vmatprep.subr.bf16.mxu0 0
    %166 = vmatpush1.bf16.msra.mxu0 0
    %167 = vmatprep.subr.bf16.mxu0 0
    %168 = vmatpush1.bf16.msra.mxu0 0
    %169 = vmatprep.mubr.bf16.mxu0 0
    %170 = vmatmul.mubr.bf16.gmra.mrb[0].mxu0 %v122
    %v171 = vpop.f32.mrb[0].mxu0
    %v172 = vadd.f32 0.0, %v171
    %v173 = vpop.f32.mrb[0].mxu0
    %v174 = vadd.f32 0.0, %v173
    %v175 = vpop.f32.mrb[0].mxu0
    %v176 = vadd.f32 0.0, %v175
    %v177 = vpop.f32.mrb[0].mxu0
    %v178 = vadd.f32 0.0, %v177
    %179 = vdwg.mxu0
    %180 = vmatprep.subr.bf16.mxu0 %v111
    %181 = vmatpush1.bf16.msra.mxu0 %v110
    %182 = vmatprep.subr.bf16.mxu0 %v135
    %183 = vmatpush1.bf16.msra.mxu0 %v132
    %184 = vmatprep.subr.bf16.mxu0 0
    %185 = vmatpush1.bf16.msra.mxu0 0
    %186 = vmatprep.subr.bf16.mxu0 0
    %187 = vmatpush1.bf16.msra.mxu0 0
    %188 = vmatprep.subr.bf16.mxu0 0
    %189 = vmatpush1.bf16.msra.mxu0 0
    %190 = vmatprep.subr.bf16.mxu0 0
    %191 = vmatpush1.bf16.msra.mxu0 0
    %192 = vmatprep.subr.bf16.mxu0 0
    %193 = vmatpush1.bf16.msra.mxu0 0
    %194 = vmatprep.subr.bf16.mxu0 0
    %195 = vmatpush1.bf16.msra.mxu0 0
    %196 = vmatprep.subr.bf16.mxu0 0
    %197 = vmatpush1.bf16.msra.mxu0 0
    %198 = vmatprep.subr.bf16.mxu0 0
    %199 = vmatpush1.bf16.msra.mxu0 0
    %200 = vmatprep.subr.bf16.mxu0 0
    %201 = vmatpush1.bf16.msra.mxu0 0
    %202 = vmatprep.subr.bf16.mxu0 0
    %203 = vmatpush1.bf16.msra.mxu0 0
    %204 = vmatprep.subr.bf16.mxu0 0
    %205 = vmatpush1.bf16.msra.mxu0 0
    %206 = vmatprep.subr.bf16.mxu0 0
    %207 = vmatpush1.bf16.msra.mxu0 0
    %208 = vmatprep.subr.bf16.mxu0 0
    %209 = vmatpush1.bf16.msra.mxu0 0
    %210 = vmatprep.subr.bf16.mxu0 0
    %211 = vmatpush1.bf16.msra.mxu0 0
    %212 = vmatprep.mubr.bf16.mxu0 0
    %213 = vmatmul.mubr.bf16.gmra.mrb[0].mxu0 %v122
    %v214 = vpop.f32.mrb[0].mxu0
    %v215 = vadd.f32 0.0, %v214
    %v216 = vpop.f32.mrb[0].mxu0
    %v217 = vadd.f32 0.0, %v216
    %v218 = vpop.f32.mrb[0].mxu0
    %v219 = vadd.f32 0.0, %v218
    %v220 = vpop.f32.mrb[0].mxu0
    %v221 = vadd.f32 0.0, %v220
    %222 = vdwg.mxu0
    %v223 = vld [vmem:[%s2] sm:$0x7]
    %v225 = vlaneseq
    %v226 = vshrl.u32 %v225, 7
    %v227 = vsub.s32 0, %v226
    %v228 = vrot.slane %v223, %v227
    %v229 = vlaneseq
    %v230 = vshrl.u32 %v229, 7
    %v231 = vsub.s32 1, %v230
    %v232 = vrot.slane %v223, %v231
    %v233 = vlaneseq
    %v234 = vshrl.u32 %v233, 7
    %v235 = vsub.s32 2, %v234
    %v236 = vrot.slane %v223, %v235
    %v240 = vadd.f32 %v172, %v228
    %v241 = vadd.f32 %v174, %v232
    %v242 = vadd.f32 %v215, %v236
    %v243 = vadd.f32 %v176, %v228
    %v244 = vadd.f32 %v178, %v232
    %v245 = vadd.f32 %v219, %v236
    %v246 = vmax.f32 %v240, 0.0
    %v247 = vmax.f32 %v241, 0.0
    %v248 = vmax.f32 %v242, 0.0
    %v249 = vmax.f32 %v243, 0.0
    %v250 = vmax.f32 %v244, 0.0
    %v251 = vmax.f32 %v245, 0.0
    %v252 = vld [vmem:[%s3] sm:$0x1]
    %v254 = vlaneseq
    %v255 = vshrl.u32 %v254, 7
    %v256 = vsub.s32 0, %v255
    %v257 = vrot.slane %v252, %v256
    %v259 = vadd.f32 %v217, %v257
    %v260 = vadd.f32 %v221, %v257
    %261 = vmax.xlane.f32.xlu0 %v259
    %v262 = vpop.xlane.xlu0 %261
    %263 = vmax.xlane.f32.xlu0 %v260
    %v264 = vpop.xlane.xlu0 %263
    %v265 = vsub.f32 %v259, %v262
    %v266 = vsub.f32 %v260, %v264
    %v267 = vmul.f32 %v265, 1.442695
    %v268 = vpow.pop %v267
    %v269 = vmul.f32 %v266, 1.442695
    %v270 = vpow.pop %v269
    %271 = vadd.xlane.f32.xlu0 %v268
    %v272 = vpop.xlane.xlu0 %271
    %273 = vadd.xlane.f32.xlu0 %v270
    %v274 = vpop.xlane.xlu0 %273
    %v275 = vrcp.pop %v272
    %v276 = vmul.f32 %v268, %v275
    %v277 = vrcp.pop %v274
    %v278 = vmul.f32 %v270, %v277
    %279 = vst [vmem:[#allocation9] sm:$0xff] %v276
    %280 = vst [vmem:[#allocation9 + $0x8] sm:$0xff] %v278
    %v281 = vld [vmem:[%s5] sm:$0x7]
    %v282 = vpack.c.bf16 %v249, %v246
    %v283 = vld [vmem:[#allocation7] sm:$0xf]
    %v284 = vld [vmem:[#allocation7 + $0x4] sm:$0xf]
    %v285 = vld [vmem:[#allocation7 + $0x8] sm:$0xf]
    %v286 = vld [vmem:[#allocation7 + $0xc] sm:$0xf]
    %v287 = vld [vmem:[#allocation7 + $0x10] sm:$0xf]
    %v288 = vld [vmem:[#allocation7 + $0x14] sm:$0xf]
    %v289 = vld [vmem:[#allocation7 + $0x18] sm:$0xf]
    %v290 = vld [vmem:[#allocation7 + $0x1c] sm:$0xf]
    %v291 = vld [vmem:[#allocation7 + $0x20] sm:$0xf]
    %v292 = vld [vmem:[#allocation7 + $0x24] sm:$0xf]
    %v293 = vld [vmem:[#allocation7 + $0x28] sm:$0xf]
    %v294 = vld [vmem:[#allocation7 + $0x2c] sm:$0xf]
    %v295 = vld [vmem:[#allocation7 + $0x30] sm:$0xf]
    %v296 = vld [vmem:[#allocation7 + $0x34] sm:$0xf]
    %v297 = vld [vmem:[#allocation7 + $0x38] sm:$0xf]
    %v298 = vld [vmem:[#allocation7 + $0x3c] sm:$0xf]
    %v299 = vlaneseq
    %v300 = vshrl.u32 %v299, 7
    %v301 = vsub.s32 0, %v300
    %v302 = vrot.slane %v281, %v301
    %v319 = vunpack.c.l.b16 %v283
    %v320 = vunpack.c.l.b16 %v284
    %v321 = vunpack.c.l.b16 %v285
    %v322 = vunpack.c.l.b16 %v286
    %v323 = vunpack.c.l.b16 %v287
    %v324 = vunpack.c.l.b16 %v288
    %v325 = vunpack.c.l.b16 %v289
    %v326 = vunpack.c.l.b16 %v290
    %v327 = vunpack.c.l.b16 %v291
    %v328 = vunpack.c.l.b16 %v292
    %v329 = vunpack.c.l.b16 %v293
    %v330 = vunpack.c.l.b16 %v294
    %v331 = vunpack.c.l.b16 %v295
    %v332 = vunpack.c.l.b16 %v296
    %v333 = vunpack.c.l.b16 %v297
    %v334 = vunpack.c.l.b16 %v298
    %v335 = vpack.c.b16 %v320, %v319
    %v336 = vpack.c.b16 %v322, %v321
    %v337 = vpack.c.b16 %v324, %v323
    %v338 = vpack.c.b16 %v326, %v325
    %v339 = vpack.c.b16 %v328, %v327
    %v340 = vpack.c.b16 %v330, %v329
    %v341 = vpack.c.b16 %v332, %v331
    %v342 = vpack.c.b16 %v334, %v333
    %351 = vmatprep.subr.bf16.mxu0 0
    %352 = vmatpush1.bf16.msra.mxu0 %v335
    %353 = vmatprep.subr.bf16.mxu0 0
    %354 = vmatpush1.bf16.msra.mxu0 %v336
    %355 = vmatprep.subr.bf16.mxu0 0
    %356 = vmatpush1.bf16.msra.mxu0 %v337
    %357 = vmatprep.subr.bf16.mxu0 0
    %358 = vmatpush1.bf16.msra.mxu0 %v338
    %359 = vmatprep.subr.bf16.mxu0 0
    %360 = vmatpush1.bf16.msra.mxu0 %v339
    %361 = vmatprep.subr.bf16.mxu0 0
    %362 = vmatpush1.bf16.msra.mxu0 %v340
    %363 = vmatprep.subr.bf16.mxu0 0
    %364 = vmatpush1.bf16.msra.mxu0 %v341
    %365 = vmatprep.subr.bf16.mxu0 0
    %366 = vmatpush1.bf16.msra.mxu0 %v342
    %367 = vmatprep.subr.bf16.mxu0 0
    %368 = vmatpush1.bf16.msra.mxu0 0
    %369 = vmatprep.subr.bf16.mxu0 0
    %370 = vmatpush1.bf16.msra.mxu0 0
    %371 = vmatprep.subr.bf16.mxu0 0
    %372 = vmatpush1.bf16.msra.mxu0 0
    %373 = vmatprep.subr.bf16.mxu0 0
    %374 = vmatpush1.bf16.msra.mxu0 0
    %375 = vmatprep.subr.bf16.mxu0 0
    %376 = vmatpush1.bf16.msra.mxu0 0
    %377 = vmatprep.subr.bf16.mxu0 0
    %378 = vmatpush1.bf16.msra.mxu0 0
    %379 = vmatprep.subr.bf16.mxu0 0
    %380 = vmatpush1.bf16.msra.mxu0 0
    %381 = vmatprep.subr.bf16.mxu0 0
    %382 = vmatpush1.bf16.msra.mxu0 0
    %383 = vmatprep.mubr.bf16.mxu0 0
    %384 = vmatmul.mubr.bf16.gmra.mrb[0].mxu0 %v282
    %v385 = vpop.f32.mrb[0].mxu0
    %v386 = vadd.f32 %v302, %v385
    %v387 = vpop.f32.mrb[0].mxu0
    %v388 = vpop.f32.mrb[0].mxu0
    %v389 = vadd.f32 %v302, %v388
    %v390 = vpop.f32.mrb[0].mxu0
    %391 = vdwg.mxu0
    %v392 = vmax.f32 %v386, 0.0
    %v393 = vmax.f32 %v389, 0.0
    %395 = vset.pattern.permute.xlu0 0
    %396 = vperm.xlu0 %395, %v276
    %v397 = vpop.permute.xlu0 %396
    %400 = vset.pattern.permute.xlu0 0
    %401 = vperm.xlu0 %400, %v278
    %v402 = vpop.permute.xlu0 %401
    %v404 = vmul.f32 %v397, %v392
    %v405 = vmul.f32 %v402, %v393
    %v406 = vadd.f32 %v404, 0.0
    %v407 = vadd.f32 %v405, 0.0
    %v408 = vpack.c.bf16 %v250, %v247
    %s409 = scalar_lea.vmem [#allocation7], 64
    %v410 = vld [vmem:[%s409] sm:$0xf]
    %v411 = vld [vmem:[%s409 + $0x4] sm:$0xf]
    %v412 = vld [vmem:[%s409 + $0x8] sm:$0xf]
    %v413 = vld [vmem:[%s409 + $0xc] sm:$0xf]
    %v414 = vld [vmem:[%s409 + $0x10] sm:$0xf]
    %v415 = vld [vmem:[%s409 + $0x14] sm:$0xf]
    %v416 = vld [vmem:[%s409 + $0x18] sm:$0xf]
    %v417 = vld [vmem:[%s409 + $0x1c] sm:$0xf]
    %v418 = vld [vmem:[%s409 + $0x20] sm:$0xf]
    %v419 = vld [vmem:[%s409 + $0x24] sm:$0xf]
    %v420 = vld [vmem:[%s409 + $0x28] sm:$0xf]
    %v421 = vld [vmem:[%s409 + $0x2c] sm:$0xf]
    %v422 = vld [vmem:[%s409 + $0x30] sm:$0xf]
    %v423 = vld [vmem:[%s409 + $0x34] sm:$0xf]
    %v424 = vld [vmem:[%s409 + $0x38] sm:$0xf]
    %v425 = vld [vmem:[%s409 + $0x3c] sm:$0xf]
    %v426 = vlaneseq
    %v427 = vshrl.u32 %v426, 7
    %v428 = vsub.s32 1, %v427
    %v429 = vrot.slane %v281, %v428
    %v446 = vunpack.c.l.b16 %v410
    %v447 = vunpack.c.l.b16 %v411
    %v448 = vunpack.c.l.b16 %v412
    %v449 = vunpack.c.l.b16 %v413
    %v450 = vunpack.c.l.b16 %v414
    %v451 = vunpack.c.l.b16 %v415
    %v452 = vunpack.c.l.b16 %v416
    %v453 = vunpack.c.l.b16 %v417
    %v454 = vunpack.c.l.b16 %v418
    %v455 = vunpack.c.l.b16 %v419
    %v456 = vunpack.c.l.b16 %v420
    %v457 = vunpack.c.l.b16 %v421
    %v458 = vunpack.c.l.b16 %v422
    %v459 = vunpack.c.l.b16 %v423
    %v460 = vunpack.c.l.b16 %v424
    %v461 = vunpack.c.l.b16 %v425
    %v462 = vpack.c.b16 %v447, %v446
    %v463 = vpack.c.b16 %v449, %v448
    %v464 = vpack.c.b16 %v451, %v450
    %v465 = vpack.c.b16 %v453, %v452
    %v466 = vpack.c.b16 %v455, %v454
    %v467 = vpack.c.b16 %v457, %v456
    %v468 = vpack.c.b16 %v459, %v458
    %v469 = vpack.c.b16 %v461, %v460
    %478 = vmatprep.subr.bf16.mxu0 0
    %479 = vmatpush1.bf16.msra.mxu0 %v462
    %480 = vmatprep.subr.bf16.mxu0 0
    %481 = vmatpush1.bf16.msra.mxu0 %v463
    %482 = vmatprep.subr.bf16.mxu0 0
    %483 = vmatpush1.bf16.msra.mxu0 %v464
    %484 = vmatprep.subr.bf16.mxu0 0
    %485 = vmatpush1.bf16.msra.mxu0 %v465
    %486 = vmatprep.subr.bf16.mxu0 0
    %487 = vmatpush1.bf16.msra.mxu0 %v466
    %488 = vmatprep.subr.bf16.mxu0 0
    %489 = vmatpush1.bf16.msra.mxu0 %v467
    %490 = vmatprep.subr.bf16.mxu0 0
    %491 = vmatpush1.bf16.msra.mxu0 %v468
    %492 = vmatprep.subr.bf16.mxu0 0
    %493 = vmatpush1.bf16.msra.mxu0 %v469
    %494 = vmatprep.subr.bf16.mxu0 0
    %495 = vmatpush1.bf16.msra.mxu0 0
    %496 = vmatprep.subr.bf16.mxu0 0
    %497 = vmatpush1.bf16.msra.mxu0 0
    %498 = vmatprep.subr.bf16.mxu0 0
    %499 = vmatpush1.bf16.msra.mxu0 0
    %500 = vmatprep.subr.bf16.mxu0 0
    %501 = vmatpush1.bf16.msra.mxu0 0
    %502 = vmatprep.subr.bf16.mxu0 0
    %503 = vmatpush1.bf16.msra.mxu0 0
    %504 = vmatprep.subr.bf16.mxu0 0
    %505 = vmatpush1.bf16.msra.mxu0 0
    %506 = vmatprep.subr.bf16.mxu0 0
    %507 = vmatpush1.bf16.msra.mxu0 0
    %508 = vmatprep.subr.bf16.mxu0 0
    %509 = vmatpush1.bf16.msra.mxu0 0
    %510 = vmatprep.mubr.bf16.mxu0 0
    %511 = vmatmul.mubr.bf16.gmra.mrb[0].mxu0 %v408
    %v512 = vpop.f32.mrb[0].mxu0
    %v513 = vadd.f32 %v429, %v512
    %v514 = vpop.f32.mrb[0].mxu0
    %v515 = vpop.f32.mrb[0].mxu0
    %v516 = vadd.f32 %v429, %v515
    %v517 = vpop.f32.mrb[0].mxu0
    %518 = vdwg.mxu0
    %v519 = vmax.f32 %v513, 0.0
    %v520 = vmax.f32 %v516, 0.0
    %521 = vset.pattern.permute.xlu0 1
    %522 = vperm.xlu0 %521, %v276
    %v523 = vpop.permute.xlu0 %522
    %525 = vset.pattern.permute.xlu0 1
    %526 = vperm.xlu0 %525, %v278
    %v527 = vpop.permute.xlu0 %526
    %v529 = vmul.f32 %v523, %v519
    %v530 = vmul.f32 %v527, %v520
    %v531 = vadd.f32 %v406, %v529
    %v532 = vadd.f32 %v407, %v530
    %v533 = vpack.c.bf16 %v251, %v248
    %s534 = scalar_lea.vmem [#allocation7], 128
    %v535 = vld [vmem:[%s534] sm:$0xf]
    %v536 = vld [vmem:[%s534 + $0x4] sm:$0xf]
    %v537 = vld [vmem:[%s534 + $0x8] sm:$0xf]
    %v538 = vld [vmem:[%s534 + $0xc] sm:$0xf]
    %v539 = vld [vmem:[%s534 + $0x10] sm:$0xf]
    %v540 = vld [vmem:[%s534 + $0x14] sm:$0xf]
    %v541 = vld [vmem:[%s534 + $0x18] sm:$0xf]
    %v542 = vld [vmem:[%s534 + $0x1c] sm:$0xf]
    %v543 = vld [vmem:[%s534 + $0x20] sm:$0xf]
    %v544 = vld [vmem:[%s534 + $0x24] sm:$0xf]
    %v545 = vld [vmem:[%s534 + $0x28] sm:$0xf]
    %v546 = vld [vmem:[%s534 + $0x2c] sm:$0xf]
    %v547 = vld [vmem:[%s534 + $0x30] sm:$0xf]
    %v548 = vld [vmem:[%s534 + $0x34] sm:$0xf]
    %v549 = vld [vmem:[%s534 + $0x38] sm:$0xf]
    %v550 = vld [vmem:[%s534 + $0x3c] sm:$0xf]
    %v551 = vlaneseq
    %v552 = vshrl.u32 %v551, 7
    %v553 = vsub.s32 2, %v552
    %v554 = vrot.slane %v281, %v553
    %v571 = vunpack.c.l.b16 %v535
    %v572 = vunpack.c.l.b16 %v536
    %v573 = vunpack.c.l.b16 %v537
    %v574 = vunpack.c.l.b16 %v538
    %v575 = vunpack.c.l.b16 %v539
    %v576 = vunpack.c.l.b16 %v540
    %v577 = vunpack.c.l.b16 %v541
    %v578 = vunpack.c.l.b16 %v542
    %v579 = vunpack.c.l.b16 %v543
    %v580 = vunpack.c.l.b16 %v544
    %v581 = vunpack.c.l.b16 %v545
    %v582 = vunpack.c.l.b16 %v546
    %v583 = vunpack.c.l.b16 %v547
    %v584 = vunpack.c.l.b16 %v548
    %v585 = vunpack.c.l.b16 %v549
    %v586 = vunpack.c.l.b16 %v550
    %v587 = vpack.c.b16 %v572, %v571
    %v588 = vpack.c.b16 %v574, %v573
    %v589 = vpack.c.b16 %v576, %v575
    %v590 = vpack.c.b16 %v578, %v577
    %v591 = vpack.c.b16 %v580, %v579
    %v592 = vpack.c.b16 %v582, %v581
    %v593 = vpack.c.b16 %v584, %v583
    %v594 = vpack.c.b16 %v586, %v585
    %603 = vmatprep.subr.bf16.mxu0 0
    %604 = vmatpush1.bf16.msra.mxu0 %v587
    %605 = vmatprep.subr.bf16.mxu0 0
    %606 = vmatpush1.bf16.msra.mxu0 %v588
    %607 = vmatprep.subr.bf16.mxu0 0
    %608 = vmatpush1.bf16.msra.mxu0 %v589
    %609 = vmatprep.subr.bf16.mxu0 0
    %610 = vmatpush1.bf16.msra.mxu0 %v590
    %611 = vmatprep.subr.bf16.mxu0 0
    %612 = vmatpush1.bf16.msra.mxu0 %v591
    %613 = vmatprep.subr.bf16.mxu0 0
    %614 = vmatpush1.bf16.msra.mxu0 %v592
    %615 = vmatprep.subr.bf16.mxu0 0
    %616 = vmatpush1.bf16.msra.mxu0 %v593
    %617 = vmatprep.subr.bf16.mxu0 0
    %618 = vmatpush1.bf16.msra.mxu0 %v594
    %619 = vmatprep.subr.bf16.mxu0 0
    %620 = vmatpush1.bf16.msra.mxu0 0
    %621 = vmatprep.subr.bf16.mxu0 0
    %622 = vmatpush1.bf16.msra.mxu0 0
    %623 = vmatprep.subr.bf16.mxu0 0
    %624 = vmatpush1.bf16.msra.mxu0 0
    %625 = vmatprep.subr.bf16.mxu0 0
    %626 = vmatpush1.bf16.msra.mxu0 0
    %627 = vmatprep.subr.bf16.mxu0 0
    %628 = vmatpush1.bf16.msra.mxu0 0
    %629 = vmatprep.subr.bf16.mxu0 0
    %630 = vmatpush1.bf16.msra.mxu0 0
    %631 = vmatprep.subr.bf16.mxu0 0
    %632 = vmatpush1.bf16.msra.mxu0 0
    %633 = vmatprep.subr.bf16.mxu0 0
    %634 = vmatpush1.bf16.msra.mxu0 0
    %635 = vmatprep.mubr.bf16.mxu0 0
    %636 = vmatmul.mubr.bf16.gmra.mrb[0].mxu0 %v533
    %v637 = vpop.f32.mrb[0].mxu0
    %v638 = vadd.f32 %v554, %v637
    %v639 = vpop.f32.mrb[0].mxu0
    %v640 = vpop.f32.mrb[0].mxu0
    %v641 = vadd.f32 %v554, %v640
    %v642 = vpop.f32.mrb[0].mxu0
    %643 = vdwg.mxu0
    %v644 = vmax.f32 %v638, 0.0
    %v645 = vmax.f32 %v641, 0.0
    %646 = vset.pattern.permute.xlu0 2
    %647 = vperm.xlu0 %646, %v276
    %v648 = vpop.permute.xlu0 %647
    %650 = vset.pattern.permute.xlu0 2
    %651 = vperm.xlu0 %650, %v278
    %v652 = vpop.permute.xlu0 %651
    %v654 = vmul.f32 %v648, %v644
    %v655 = vmul.f32 %v652, %v645
    %v656 = vadd.f32 %v531, %v654
    %v657 = vadd.f32 %v532, %v655
    %658 = vst [vmem:[#allocation8] sm:$0xff] %v656
    %659 = vst [vmem:[#allocation8 + $0x8] sm:$0xff] %v657
    // Predicated region
    $region38: #{tpu_custom_call.1} parent=1 // pred_check
      _
    $region39: #{tpu_custom_call.1} parent=1 // pred_check_branch
      %661 = sbr.rel (0) target = $region41
    $region40: #{tpu_custom_call.1} parent=1 // pred_region
      %s663 = ssub.s32 256, 256
      %664 = vsyncadd [#allocation4], %s663
      %s665 = sshll.u32 [#allocation8], 4
      %s666 = int_to_ptr.vmem [resolvable:$true] %s665
      %671 = dma.vmem_to_hbm [thread:$0]  %s666, 256, %s6, [#allocation4], 128, 128, 8
    $region41: #{tpu_custom_call.1} parent=1 // pred_fallthru
      _
    // Predicated region
    $region42: #{tpu_custom_call.1} parent=1 // pred_check
      _
    $region43: #{tpu_custom_call.1} parent=1 // pred_check_branch
      %673 = sbr.rel (0) target = $region45
    $region44: #{tpu_custom_call.1} parent=1 // pred_region
      %s675 = ssub.s32 256, 256
      %676 = vsyncadd [#allocation10], %s675
      %s677 = sshll.u32 [#allocation9], 4
      %s678 = int_to_ptr.vmem [resolvable:$true] %s677
      %683 = dma.vmem_to_hbm [thread:$0]  %s678, 256, %s7, [#allocation10], 128, 128, 8
    $region45: #{tpu_custom_call.1} parent=1 // pred_fallthru
      _
    // Predicated region
    $region46: #{tpu_custom_call.1} parent=1 // pred_check
      _
    $region47: #{tpu_custom_call.1} parent=1 // pred_check_branch
      %685 = sbr.rel (0) target = $region49
    $region48: #{tpu_custom_call.1} parent=1 // pred_region
      %686 = dma.done [#allocation4], 256
    $region49: #{tpu_custom_call.1} parent=1 // pred_fallthru
      _
    // Predicated region
    $region50: #{tpu_custom_call.1} parent=1 // pred_check
      _
    $region51: #{tpu_custom_call.1} parent=1 // pred_check_branch
      %688 = sbr.rel (0) target = $region53
    $region52: #{tpu_custom_call.1} parent=1 // pred_region
      %689 = dma.done [#allocation10], 256
    $region53: #{tpu_custom_call.1} parent=1 // pred_fallthru
      _
    %690 = vsyncpa [#allocation3], 1
    %691 = vsyncpa [#allocation6], 1
    %692 = vsyncpa [#allocation4], 1
    %693 = vsyncpa [#allocation10], 1

</llo_original>
